<compile_context>
chip_gen: v7x
topology: tpu7x:2x2x1
jax: 0.10.0
libtpu: 0.0.40
codegen_flags: <defaults>
</compile_context>

<pallas_src>
import jax
import jax.numpy as jnp
from jax.experimental import pallas as pl
from jax.experimental.pallas import tpu as pltpu

TILE = 512   # batch tile width (lanes); 4x128 keeps the EUP tanh chain pipelined


def rnn_model_kernel(tokens_ref, emb_t_ref, w_ih_ref, w_hh_ref, w_c_ref, b_c_ref,
                     out_ref, z_ref, h_ref):
    # tokens_ref : (S, TILE) int32 VMEM  -- token ids, batch on lanes
    # emb_t_ref  : (D, V)    f32   VMEM  -- embedding table, transposed, resident
    # w_ih_ref   : (1, S)    f32   SMEM  -- RNN weight_ih_l0 (hidden=1, input=S)
    # w_hh_ref   : (1, 1)    f32   SMEM  -- RNN weight_hh_l0 (scalar)
    # w_c_ref    : (1, D)    f32   VMEM  -- classify weight, resident
    # b_c_ref    : (1, 1)    f32   SMEM  -- classify bias
    # out_ref    : (1, TILE) f32   VMEM  -- sigmoid(logits), batch on lanes
    # z_ref      : (D, TILE) f32   VMEM scratch -- RNN input projection
    # h_ref      : (D, TILE) f32   VMEM scratch -- per-step hidden states
    S, BT = tokens_ref.shape
    D, V = emb_t_ref.shape

    # --- W_ih-weighted one-hot, built directly in 2-D (V, BT): pure VPU selects ---
    # onehot_w[v, b] = sum_j W_ih[0, j] * 1[token[b, j] == v]
    iota_v = jax.lax.broadcasted_iota(jnp.int32, (V, BT), 0)
    onehot_w = jnp.zeros((V, BT), jnp.float32)
    for j in range(S):                                    # S = 6, static unroll
        tok_j = tokens_ref[j, :]                          # (BT,) int32
        onehot_w = onehot_w + jnp.where(iota_v == tok_j[None, :],
                                        w_ih_ref[0, j], 0.0)

    # --- RNN input projection: one MXU pass, staged once into VMEM scratch -------
    # z[d, b] = sum_j W_ih[0, j] * Emb[token[b, j], d]
    z_ref[...] = jnp.dot(emb_t_ref[...], onehot_w,
                         preferred_element_type=jnp.float32)   # (D, BT)

    # --- recurrence, fully unrolled; per-step z row-loads are cheap vlds ---------
    # h_t = tanh(z_t + W_hh * h_{t-1})
    a_vec = jnp.full((BT,), w_hh_ref[0, 0], jnp.float32)       # splat hoisted
    h = jnp.zeros((BT,), jnp.float32)
    for t in range(D):                                    # D = 32, static unroll
        h = jnp.tanh(z_ref[t, :] + a_vec * h)
        h_ref[t, :] = h                                   # row store, off the chain

    # --- classifier fused as a second MXU pass: logits = W_c @ H + b_c -----------
    logits = jnp.dot(w_c_ref[...], h_ref[...],
                     preferred_element_type=jnp.float32)[0, :] + b_c_ref[0, 0]
    out_ref[0, :] = 1.0 / (1.0 + jnp.exp(-logits))


def torch_model_forward(tokens, params, y=None):
    emb = params["embedding"]        # (V, D)
    w_ih = params["w_ih"]            # (1, S)
    w_hh = params["w_hh"]            # (1, 1)
    w_c = params["w_classify"]       # (1, D)
    b_c = params["b_classify"]       # (1,)
    B, S = tokens.shape
    V, D = emb.shape

    nb = pl.cdiv(B, TILE)
    b_pad = nb * TILE

    # Glue: feature-major / lane-dense layout for the kernel.
    tokens_t = jnp.zeros((S, b_pad), jnp.int32).at[:, :B].set(
        tokens.T.astype(jnp.int32))                       # (S, B_pad), batch on lanes
    emb_t = emb.T                                         # (D, V)
    b_c_2d = b_c.reshape(1, 1)

    smem = pltpu.MemorySpace.SMEM
    vmem = pltpu.MemorySpace.VMEM
    out = pl.pallas_call(
        rnn_model_kernel,
        out_shape=jax.ShapeDtypeStruct((1, b_pad), jnp.float32),
        grid=(nb,),
        in_specs=[
            pl.BlockSpec((S, TILE), lambda i: (0, i)),    # tokens_t, tiled over batch
            pl.BlockSpec(memory_space=vmem),              # emb_t, whole-array resident
            pl.BlockSpec(memory_space=smem),              # w_ih
            pl.BlockSpec(memory_space=smem),              # w_hh
            pl.BlockSpec(memory_space=vmem),              # w_classify, resident
            pl.BlockSpec(memory_space=smem),              # b_classify
        ],
        out_specs=pl.BlockSpec((1, TILE), lambda i: (0, i)),
        scratch_shapes=[pltpu.VMEM((D, TILE), jnp.float32),   # z
                        pltpu.VMEM((D, TILE), jnp.float32)],  # h
        compiler_params=pltpu.CompilerParams(
            dimension_semantics=("parallel",)),
    )(tokens_t, emb_t, w_ih, w_hh, w_c, b_c_2d)

    y_pred = out[0, :B].reshape(B, 1)   # (B, 1), matches PyTorch y_pred
    if y is not None:
        # Glue: nn.functional.mse_loss (mean reduction) on the kernel output.
        return jnp.mean((y_pred - y) ** 2)
    return y_pred


def reference_forward(tokens, params):
    """Pure-JAX reference mirroring the PyTorch forward exactly."""
    emb, w_ih, w_hh = params["embedding"], params["w_ih"], params["w_hh"]
    w_c, b_c = params["w_classify"], params["b_classify"]
    x = emb[tokens]                          # (B, S, D)
    x = jnp.transpose(x, (0, 2, 1))          # (B, D, S)

    def step(h, xt):                         # xt: (B, S)
        h_new = jnp.tanh(xt @ w_ih[0] + w_hh[0, 0] * h)
        return h_new, h_new

    h0 = jnp.zeros((tokens.shape[0],), jnp.float32)
    _, hs = jax.lax.scan(step, h0, jnp.transpose(x, (1, 0, 2)))   # hs: (D, B)
    h_bd = hs.T                              # (B, D)  == RNN outputs squeezed
    logits = h_bd @ w_c[0] + b_c[0]          # (B,)
    return jax.nn.sigmoid(logits)[:, None]   # (B, 1)


if __name__ == "__main__":
    V = 27          # len(vocab)
    D = 32          # vector_dim
    S = 6           # sequence length (must be 6: nn.RNN input_size=6)

    key = jax.random.PRNGKey(0)
    ks = jax.random.split(key, 7)
    params = {
        "embedding":  jax.random.normal(ks[0], (V, D), jnp.float32) * 0.5,
        "w_ih":       jax.random.normal(ks[1], (1, S), jnp.float32) * 0.4,
        "w_hh":       jax.random.normal(ks[2], (1, 1), jnp.float32) * 0.4,
        "w_classify": jax.random.normal(ks[3], (1, D), jnp.float32) * 0.2,
        "b_classify": jax.random.normal(ks[4], (1,), jnp.float32) * 0.1,
    }

    # Small-batch check (grid=(1,)).
    B = 4
    tokens = jax.random.randint(ks[5], (B, S), 0, V, dtype=jnp.int32)
    y_pred = jax.block_until_ready(torch_model_forward(tokens, params))
    ref = reference_forward(tokens, params)
    assert y_pred.shape == (B, 1), y_pred.shape
    assert jnp.allclose(y_pred, ref, rtol=1e-5, atol=1e-5), (y_pred, ref)

    # Multi-tile check (grid=(2,), exercises the parallel grid / padded tail lanes).
    B2 = 600
    tokens2 = jax.random.randint(ks[6], (B2, S), 0, V, dtype=jnp.int32)
    y_pred2 = jax.block_until_ready(torch_model_forward(tokens2, params))
    ref2 = reference_forward(tokens2, params)
    assert y_pred2.shape == (B2, 1), y_pred2.shape
    assert jnp.allclose(y_pred2, ref2, rtol=1e-5, atol=1e-5)

    print("KERNEL_OK")
</pallas_src>

<mosaic_0001>
module attributes {stable_mosaic.version = 11 : i64} {
  func.func @rnn_model_kernel(%arg0: i32, %arg1: memref<6x512xi32, #tpu.memory_space<vmem>>, %arg2: memref<32x27xf32, #tpu.memory_space<vmem>>, %arg3: memref<1x6xf32, #tpu.memory_space<smem>>, %arg4: memref<1x1xf32, #tpu.memory_space<smem>>, %arg5: memref<1x32xf32, #tpu.memory_space<vmem>>, %arg6: memref<1x1xf32, #tpu.memory_space<smem>>, %arg7: memref<1x512xf32, #tpu.memory_space<vmem>>, %arg8: memref<32x512xf32, #tpu.memory_space<vmem>>, %arg9: memref<32x512xf32, #tpu.memory_space<vmem>>) attributes {dimension_semantics = [#tpu.dimension_semantics<parallel>], iteration_bounds = array<i64: 1>, scalar_prefetch = 0 : i64, scratch_operands = 2 : i64, tpu.core_type = #tpu.core_type<tc>, window_params = [{transform_indices = @transform_0, window_bounds = array<i64: 6, 512>}, {pipeline_mode = #tpu.pipeline_mode<synchronous>, transform_indices = @transform_1, window_bounds = array<i64: 32, 27>}, {transform_indices = @transform_2, window_bounds = array<i64: 1, 6>}, {transform_indices = @transform_3, window_bounds = array<i64: 1, 1>}, {pipeline_mode = #tpu.pipeline_mode<synchronous>, transform_indices = @transform_4, window_bounds = array<i64: 1, 32>}, {transform_indices = @transform_5, window_bounds = array<i64: 1, 1>}, {transform_indices = @transform_6, window_bounds = array<i64: 1, 512>}]} {
    %0 = tpu.iota {dimensions = array<i32: 0>} : vector<27x512xi32>
    %cst = arith.constant 0.000000e+00 : f32
    %1 = vector.broadcast %cst : f32 to vector<27x512xf32>
    %c0 = arith.constant 0 : index
    %c0_0 = arith.constant 0 : index
    %2 = vector.load %arg1[%c0, %c0_0] : memref<6x512xi32, #tpu.memory_space<vmem>>, vector<1x512xi32>
    %3 = vector.shape_cast %2 : vector<1x512xi32> to vector<512xi32>
    %4 = vector.shape_cast %3 : vector<512xi32> to vector<1x512xi32>
    %5 = vector.broadcast %4 : vector<1x512xi32> to vector<27x512xi32>
    %6 = arith.cmpi eq, %0, %5 : vector<27x512xi32>
    %c0_1 = arith.constant 0 : index
    %c0_2 = arith.constant 0 : index
    %7 = memref.load %arg3[%c0_1, %c0_2] : memref<1x6xf32, #tpu.memory_space<smem>>
    %cst_3 = arith.constant 0.000000e+00 : f32
    %8 = vector.broadcast %7 : f32 to vector<27x512xf32>
    %9 = vector.broadcast %cst_3 : f32 to vector<27x512xf32>
    %10 = arith.select %6, %8, %9 : vector<27x512xi1>, vector<27x512xf32>
    %11 = arith.addf %1, %10 : vector<27x512xf32>
    %c1 = arith.constant 1 : index
    %c0_4 = arith.constant 0 : index
    %12 = vector.load %arg1[%c1, %c0_4] : memref<6x512xi32, #tpu.memory_space<vmem>>, vector<1x512xi32>
    %13 = vector.shape_cast %12 : vector<1x512xi32> to vector<512xi32>
    %14 = vector.shape_cast %13 : vector<512xi32> to vector<1x512xi32>
    %15 = vector.broadcast %14 : vector<1x512xi32> to vector<27x512xi32>
    %16 = arith.cmpi eq, %0, %15 : vector<27x512xi32>
    %c0_5 = arith.constant 0 : index
    %c1_6 = arith.constant 1 : index
    %17 = memref.load %arg3[%c0_5, %c1_6] : memref<1x6xf32, #tpu.memory_space<smem>>
    %cst_7 = arith.constant 0.000000e+00 : f32
    %18 = vector.broadcast %17 : f32 to vector<27x512xf32>
    %19 = vector.broadcast %cst_7 : f32 to vector<27x512xf32>
    %20 = arith.select %16, %18, %19 : vector<27x512xi1>, vector<27x512xf32>
    %21 = arith.addf %11, %20 : vector<27x512xf32>
    %c2 = arith.constant 2 : index
    %c0_8 = arith.constant 0 : index
    %22 = vector.load %arg1[%c2, %c0_8] : memref<6x512xi32, #tpu.memory_space<vmem>>, vector<1x512xi32>
    %23 = vector.shape_cast %22 : vector<1x512xi32> to vector<512xi32>
    %24 = vector.shape_cast %23 : vector<512xi32> to vector<1x512xi32>
    %25 = vector.broadcast %24 : vector<1x512xi32> to vector<27x512xi32>
    %26 = arith.cmpi eq, %0, %25 : vector<27x512xi32>
    %c0_9 = arith.constant 0 : index
    %c2_10 = arith.constant 2 : index
    %27 = memref.load %arg3[%c0_9, %c2_10] : memref<1x6xf32, #tpu.memory_space<smem>>
    %cst_11 = arith.constant 0.000000e+00 : f32
    %28 = vector.broadcast %27 : f32 to vector<27x512xf32>
    %29 = vector.broadcast %cst_11 : f32 to vector<27x512xf32>
    %30 = arith.select %26, %28, %29 : vector<27x512xi1>, vector<27x512xf32>
    %31 = arith.addf %21, %30 : vector<27x512xf32>
    %c3 = arith.constant 3 : index
    %c0_12 = arith.constant 0 : index
    %32 = vector.load %arg1[%c3, %c0_12] : memref<6x512xi32, #tpu.memory_space<vmem>>, vector<1x512xi32>
    %33 = vector.shape_cast %32 : vector<1x512xi32> to vector<512xi32>
    %34 = vector.shape_cast %33 : vector<512xi32> to vector<1x512xi32>
    %35 = vector.broadcast %34 : vector<1x512xi32> to vector<27x512xi32>
    %36 = arith.cmpi eq, %0, %35 : vector<27x512xi32>
    %c0_13 = arith.constant 0 : index
    %c3_14 = arith.constant 3 : index
    %37 = memref.load %arg3[%c0_13, %c3_14] : memref<1x6xf32, #tpu.memory_space<smem>>
    %cst_15 = arith.constant 0.000000e+00 : f32
    %38 = vector.broadcast %37 : f32 to vector<27x512xf32>
    %39 = vector.broadcast %cst_15 : f32 to vector<27x512xf32>
    %40 = arith.select %36, %38, %39 : vector<27x512xi1>, vector<27x512xf32>
    %41 = arith.addf %31, %40 : vector<27x512xf32>
    %c4 = arith.constant 4 : index
    %c0_16 = arith.constant 0 : index
    %42 = vector.load %arg1[%c4, %c0_16] : memref<6x512xi32, #tpu.memory_space<vmem>>, vector<1x512xi32>
    %43 = vector.shape_cast %42 : vector<1x512xi32> to vector<512xi32>
    %44 = vector.shape_cast %43 : vector<512xi32> to vector<1x512xi32>
    %45 = vector.broadcast %44 : vector<1x512xi32> to vector<27x512xi32>
    %46 = arith.cmpi eq, %0, %45 : vector<27x512xi32>
    %c0_17 = arith.constant 0 : index
    %c4_18 = arith.constant 4 : index
    %47 = memref.load %arg3[%c0_17, %c4_18] : memref<1x6xf32, #tpu.memory_space<smem>>
    %cst_19 = arith.constant 0.000000e+00 : f32
    %48 = vector.broadcast %47 : f32 to vector<27x512xf32>
    %49 = vector.broadcast %cst_19 : f32 to vector<27x512xf32>
    %50 = arith.select %46, %48, %49 : vector<27x512xi1>, vector<27x512xf32>
    %51 = arith.addf %41, %50 : vector<27x512xf32>
    %c5 = arith.constant 5 : index
    %c0_20 = arith.constant 0 : index
    %52 = vector.load %arg1[%c5, %c0_20] : memref<6x512xi32, #tpu.memory_space<vmem>>, vector<1x512xi32>
    %53 = vector.shape_cast %52 : vector<1x512xi32> to vector<512xi32>
    %54 = vector.shape_cast %53 : vector<512xi32> to vector<1x512xi32>
    %55 = vector.broadcast %54 : vector<1x512xi32> to vector<27x512xi32>
    %56 = arith.cmpi eq, %0, %55 : vector<27x512xi32>
    %c0_21 = arith.constant 0 : index
    %c5_22 = arith.constant 5 : index
    %57 = memref.load %arg3[%c0_21, %c5_22] : memref<1x6xf32, #tpu.memory_space<smem>>
    %cst_23 = arith.constant 0.000000e+00 : f32
    %58 = vector.broadcast %57 : f32 to vector<27x512xf32>
    %59 = vector.broadcast %cst_23 : f32 to vector<27x512xf32>
    %60 = arith.select %56, %58, %59 : vector<27x512xi1>, vector<27x512xf32>
    %61 = arith.addf %51, %60 : vector<27x512xf32>
    %c0_24 = arith.constant 0 : index
    %c0_25 = arith.constant 0 : index
    %62 = vector.load %arg2[%c0_24, %c0_25] : memref<32x27xf32, #tpu.memory_space<vmem>>, vector<32x27xf32>
    %cst_26 = arith.constant dense<0.000000e+00> : vector<32x512xf32>
    %63 = tpu.matmul %62, %61, %cst_26 {dimension_numbers = #tpu.dot_dimension_numbers<[1], [0], [0], [1], [0, 0, 1, 1], [], []>} : vector<32x27xf32>, vector<27x512xf32>, vector<32x512xf32> -> vector<32x512xf32>
    %c0_27 = arith.constant 0 : index
    %c0_28 = arith.constant 0 : index
    %64 = vector.load %arg8[%c0_27, %c0_28] : memref<32x512xf32, #tpu.memory_space<vmem>>, vector<32x512xf32>
    tpu.vector_store %arg8[%c0_27, %c0_28], %63 {strides = array<i32>} : memref<32x512xf32, #tpu.memory_space<vmem>>, vector<32x512xf32>,
    %c0_29 = arith.constant 0 : index
    %c0_30 = arith.constant 0 : index
    %65 = memref.load %arg4[%c0_29, %c0_30] : memref<1x1xf32, #tpu.memory_space<smem>>
    %66 = vector.broadcast %65 : f32 to vector<512xf32>
    %cst_31 = arith.constant 0.000000e+00 : f32
    %67 = vector.broadcast %cst_31 : f32 to vector<512xf32>
    %c0_32 = arith.constant 0 : index
    %c0_33 = arith.constant 0 : index
    %68 = vector.load %arg8[%c0_32, %c0_33] : memref<32x512xf32, #tpu.memory_space<vmem>>, vector<1x512xf32>
    %69 = vector.shape_cast %68 : vector<1x512xf32> to vector<512xf32>
    %70 = arith.mulf %66, %67 : vector<512xf32>
    %71 = arith.addf %69, %70 : vector<512xf32>
    %72 = math.tanh %71 : vector<512xf32>
    %c0_34 = arith.constant 0 : index
    %c0_35 = arith.constant 0 : index
    %73 = vector.load %arg9[%c0_34, %c0_35] : memref<32x512xf32, #tpu.memory_space<vmem>>, vector<1x512xf32>
    %74 = vector.shape_cast %73 : vector<1x512xf32> to vector<512xf32>
    %75 = vector.shape_cast %72 : vector<512xf32> to vector<1x512xf32>
    tpu.vector_store %arg9[%c0_34, %c0_35], %75 {strides = array<i32>} : memref<32x512xf32, #tpu.memory_space<vmem>>, vector<1x512xf32>,
    %c1_36 = arith.constant 1 : index
    %c0_37 = arith.constant 0 : index
    %76 = vector.load %arg8[%c1_36, %c0_37] : memref<32x512xf32, #tpu.memory_space<vmem>>, vector<1x512xf32>
    %77 = vector.shape_cast %76 : vector<1x512xf32> to vector<512xf32>
    %78 = arith.mulf %66, %72 : vector<512xf32>
    %79 = arith.addf %77, %78 : vector<512xf32>
    %80 = math.tanh %79 : vector<512xf32>
    %c1_38 = arith.constant 1 : index
    %c0_39 = arith.constant 0 : index
    %81 = vector.load %arg9[%c1_38, %c0_39] : memref<32x512xf32, #tpu.memory_space<vmem>>, vector<1x512xf32>
    %82 = vector.shape_cast %81 : vector<1x512xf32> to vector<512xf32>
    %83 = vector.shape_cast %80 : vector<512xf32> to vector<1x512xf32>
    tpu.vector_store %arg9[%c1_38, %c0_39], %83 {strides = array<i32>} : memref<32x512xf32, #tpu.memory_space<vmem>>, vector<1x512xf32>,
    %c2_40 = arith.constant 2 : index
    %c0_41 = arith.constant 0 : index
    %84 = vector.load %arg8[%c2_40, %c0_41] : memref<32x512xf32, #tpu.memory_space<vmem>>, vector<1x512xf32>
    %85 = vector.shape_cast %84 : vector<1x512xf32> to vector<512xf32>
    %86 = arith.mulf %66, %80 : vector<512xf32>
    %87 = arith.addf %85, %86 : vector<512xf32>
    %88 = math.tanh %87 : vector<512xf32>
    %c2_42 = arith.constant 2 : index
    %c0_43 = arith.constant 0 : index
    %89 = vector.load %arg9[%c2_42, %c0_43] : memref<32x512xf32, #tpu.memory_space<vmem>>, vector<1x512xf32>
    %90 = vector.shape_cast %89 : vector<1x512xf32> to vector<512xf32>
    %91 = vector.shape_cast %88 : vector<512xf32> to vector<1x512xf32>
    tpu.vector_store %arg9[%c2_42, %c0_43], %91 {strides = array<i32>} : memref<32x512xf32, #tpu.memory_space<vmem>>, vector<1x512xf32>,
    %c3_44 = arith.constant 3 : index
    %c0_45 = arith.constant 0 : index
    %92 = vector.load %arg8[%c3_44, %c0_45] : memref<32x512xf32, #tpu.memory_space<vmem>>, vector<1x512xf32>
    %93 = vector.shape_cast %92 : vector<1x512xf32> to vector<512xf32>
    %94 = arith.mulf %66, %88 : vector<512xf32>
    %95 = arith.addf %93, %94 : vector<512xf32>
    %96 = math.tanh %95 : vector<512xf32>
    %c3_46 = arith.constant 3 : index
    %c0_47 = arith.constant 0 : index
    %97 = vector.load %arg9[%c3_46, %c0_47] : memref<32x512xf32, #tpu.memory_space<vmem>>, vector<1x512xf32>
    %98 = vector.shape_cast %97 : vector<1x512xf32> to vector<512xf32>
    %99 = vector.shape_cast %96 : vector<512xf32> to vector<1x512xf32>
    tpu.vector_store %arg9[%c3_46, %c0_47], %99 {strides = array<i32>} : memref<32x512xf32, #tpu.memory_space<vmem>>, vector<1x512xf32>,
    %c4_48 = arith.constant 4 : index
    %c0_49 = arith.constant 0 : index
    %100 = vector.load %arg8[%c4_48, %c0_49] : memref<32x512xf32, #tpu.memory_space<vmem>>, vector<1x512xf32>
    %101 = vector.shape_cast %100 : vector<1x512xf32> to vector<512xf32>
    %102 = arith.mulf %66, %96 : vector<512xf32>
    %103 = arith.addf %101, %102 : vector<512xf32>
    %104 = math.tanh %103 : vector<512xf32>
    %c4_50 = arith.constant 4 : index
    %c0_51 = arith.constant 0 : index
    %105 = vector.load %arg9[%c4_50, %c0_51] : memref<32x512xf32, #tpu.memory_space<vmem>>, vector<1x512xf32>
    %106 = vector.shape_cast %105 : vector<1x512xf32> to vector<512xf32>
    %107 = vector.shape_cast %104 : vector<512xf32> to vector<1x512xf32>
    tpu.vector_store %arg9[%c4_50, %c0_51], %107 {strides = array<i32>} : memref<32x512xf32, #tpu.memory_space<vmem>>, vector<1x512xf32>,
    %c5_52 = arith.constant 5 : index
    %c0_53 = arith.constant 0 : index
    %108 = vector.load %arg8[%c5_52, %c0_53] : memref<32x512xf32, #tpu.memory_space<vmem>>, vector<1x512xf32>
    %109 = vector.shape_cast %108 : vector<1x512xf32> to vector<512xf32>
    %110 = arith.mulf %66, %104 : vector<512xf32>
    %111 = arith.addf %109, %110 : vector<512xf32>
    %112 = math.tanh %111 : vector<512xf32>
    %c5_54 = arith.constant 5 : index
    %c0_55 = arith.constant 0 : index
    %113 = vector.load %arg9[%c5_54, %c0_55] : memref<32x512xf32, #tpu.memory_space<vmem>>, vector<1x512xf32>
    %114 = vector.shape_cast %113 : vector<1x512xf32> to vector<512xf32>
    %115 = vector.shape_cast %112 : vector<512xf32> to vector<1x512xf32>
    tpu.vector_store %arg9[%c5_54, %c0_55], %115 {strides = array<i32>} : memref<32x512xf32, #tpu.memory_space<vmem>>, vector<1x512xf32>,
    %c6 = arith.constant 6 : index
    %c0_56 = arith.constant 0 : index
    %116 = vector.load %arg8[%c6, %c0_56] : memref<32x512xf32, #tpu.memory_space<vmem>>, vector<1x512xf32>
    %117 = vector.shape_cast %116 : vector<1x512xf32> to vector<512xf32>
    %118 = arith.mulf %66, %112 : vector<512xf32>
    %119 = arith.addf %117, %118 : vector<512xf32>
    %120 = math.tanh %119 : vector<512xf32>
    %c6_57 = arith.constant 6 : index
    %c0_58 = arith.constant 0 : index
    %121 = vector.load %arg9[%c6_57, %c0_58] : memref<32x512xf32, #tpu.memory_space<vmem>>, vector<1x512xf32>
    %122 = vector.shape_cast %121 : vector<1x512xf32> to vector<512xf32>
    %123 = vector.shape_cast %120 : vector<512xf32> to vector<1x512xf32>
    tpu.vector_store %arg9[%c6_57, %c0_58], %123 {strides = array<i32>} : memref<32x512xf32, #tpu.memory_space<vmem>>, vector<1x512xf32>,
    %c7 = arith.constant 7 : index
    %c0_59 = arith.constant 0 : index
    %124 = vector.load %arg8[%c7, %c0_59] : memref<32x512xf32, #tpu.memory_space<vmem>>, vector<1x512xf32>
    %125 = vector.shape_cast %124 : vector<1x512xf32> to vector<512xf32>
    %126 = arith.mulf %66, %120 : vector<512xf32>
    %127 = arith.addf %125, %126 : vector<512xf32>
    %128 = math.tanh %127 : vector<512xf32>
    %c7_60 = arith.constant 7 : index
    %c0_61 = arith.constant 0 : index
    %129 = vector.load %arg9[%c7_60, %c0_61] : memref<32x512xf32, #tpu.memory_space<vmem>>, vector<1x512xf32>
    %130 = vector.shape_cast %129 : vector<1x512xf32> to vector<512xf32>
    %131 = vector.shape_cast %128 : vector<512xf32> to vector<1x512xf32>
    tpu.vector_store %arg9[%c7_60, %c0_61], %131 {strides = array<i32>} : memref<32x512xf32, #tpu.memory_space<vmem>>, vector<1x512xf32>,
    %c8 = arith.constant 8 : index
    %c0_62 = arith.constant 0 : index
    %132 = vector.load %arg8[%c8, %c0_62] : memref<32x512xf32, #tpu.memory_space<vmem>>, vector<1x512xf32>
    %133 = vector.shape_cast %132 : vector<1x512xf32> to vector<512xf32>
    %134 = arith.mulf %66, %128 : vector<512xf32>
    %135 = arith.addf %133, %134 : vector<512xf32>
    %136 = math.tanh %135 : vector<512xf32>
    %c8_63 = arith.constant 8 : index
    %c0_64 = arith.constant 0 : index
    %137 = vector.load %arg9[%c8_63, %c0_64] : memref<32x512xf32, #tpu.memory_space<vmem>>, vector<1x512xf32>
    %138 = vector.shape_cast %137 : vector<1x512xf32> to vector<512xf32>
    %139 = vector.shape_cast %136 : vector<512xf32> to vector<1x512xf32>
    tpu.vector_store %arg9[%c8_63, %c0_64], %139 {strides = array<i32>} : memref<32x512xf32, #tpu.memory_space<vmem>>, vector<1x512xf32>,
    %c9 = arith.constant 9 : index
    %c0_65 = arith.constant 0 : index
    %140 = vector.load %arg8[%c9, %c0_65] : memref<32x512xf32, #tpu.memory_space<vmem>>, vector<1x512xf32>
    %141 = vector.shape_cast %140 : vector<1x512xf32> to vector<512xf32>
    %142 = arith.mulf %66, %136 : vector<512xf32>
    %143 = arith.addf %141, %142 : vector<512xf32>
    %144 = math.tanh %143 : vector<512xf32>
    %c9_66 = arith.constant 9 : index
    %c0_67 = arith.constant 0 : index
    %145 = vector.load %arg9[%c9_66, %c0_67] : memref<32x512xf32, #tpu.memory_space<vmem>>, vector<1x512xf32>
    %146 = vector.shape_cast %145 : vector<1x512xf32> to vector<512xf32>
    %147 = vector.shape_cast %144 : vector<512xf32> to vector<1x512xf32>
    tpu.vector_store %arg9[%c9_66, %c0_67], %147 {strides = array<i32>} : memref<32x512xf32, #tpu.memory_space<vmem>>, vector<1x512xf32>,
    %c10 = arith.constant 10 : index
    %c0_68 = arith.constant 0 : index
    %148 = vector.load %arg8[%c10, %c0_68] : memref<32x512xf32, #tpu.memory_space<vmem>>, vector<1x512xf32>
    %149 = vector.shape_cast %148 : vector<1x512xf32> to vector<512xf32>
    %150 = arith.mulf %66, %144 : vector<512xf32>
    %151 = arith.addf %149, %150 : vector<512xf32>
    %152 = math.tanh %151 : vector<512xf32>
    %c10_69 = arith.constant 10 : index
    %c0_70 = arith.constant 0 : index
    %153 = vector.load %arg9[%c10_69, %c0_70] : memref<32x512xf32, #tpu.memory_space<vmem>>, vector<1x512xf32>
    %154 = vector.shape_cast %153 : vector<1x512xf32> to vector<512xf32>
    %155 = vector.shape_cast %152 : vector<512xf32> to vector<1x512xf32>
    tpu.vector_store %arg9[%c10_69, %c0_70], %155 {strides = array<i32>} : memref<32x512xf32, #tpu.memory_space<vmem>>, vector<1x512xf32>,
    %c11 = arith.constant 11 : index
    %c0_71 = arith.constant 0 : index
    %156 = vector.load %arg8[%c11, %c0_71] : memref<32x512xf32, #tpu.memory_space<vmem>>, vector<1x512xf32>
    %157 = vector.shape_cast %156 : vector<1x512xf32> to vector<512xf32>
    %158 = arith.mulf %66, %152 : vector<512xf32>
    %159 = arith.addf %157, %158 : vector<512xf32>
    %160 = math.tanh %159 : vector<512xf32>
    %c11_72 = arith.constant 11 : index
    %c0_73 = arith.constant 0 : index
    %161 = vector.load %arg9[%c11_72, %c0_73] : memref<32x512xf32, #tpu.memory_space<vmem>>, vector<1x512xf32>
    %162 = vector.shape_cast %161 : vector<1x512xf32> to vector<512xf32>
    %163 = vector.shape_cast %160 : vector<512xf32> to vector<1x512xf32>
    tpu.vector_store %arg9[%c11_72, %c0_73], %163 {strides = array<i32>} : memref<32x512xf32, #tpu.memory_space<vmem>>, vector<1x512xf32>,
    %c12 = arith.constant 12 : index
    %c0_74 = arith.constant 0 : index
    %164 = vector.load %arg8[%c12, %c0_74] : memref<32x512xf32, #tpu.memory_space<vmem>>, vector<1x512xf32>
    %165 = vector.shape_cast %164 : vector<1x512xf32> to vector<512xf32>
    %166 = arith.mulf %66, %160 : vector<512xf32>
    %167 = arith.addf %165, %166 : vector<512xf32>
    %168 = math.tanh %167 : vector<512xf32>
    %c12_75 = arith.constant 12 : index
    %c0_76 = arith.constant 0 : index
    %169 = vector.load %arg9[%c12_75, %c0_76] : memref<32x512xf32, #tpu.memory_space<vmem>>, vector<1x512xf32>
    %170 = vector.shape_cast %169 : vector<1x512xf32> to vector<512xf32>
    %171 = vector.shape_cast %168 : vector<512xf32> to vector<1x512xf32>
    tpu.vector_store %arg9[%c12_75, %c0_76], %171 {strides = array<i32>} : memref<32x512xf32, #tpu.memory_space<vmem>>, vector<1x512xf32>,
    %c13 = arith.constant 13 : index
    %c0_77 = arith.constant 0 : index
    %172 = vector.load %arg8[%c13, %c0_77] : memref<32x512xf32, #tpu.memory_space<vmem>>, vector<1x512xf32>
    %173 = vector.shape_cast %172 : vector<1x512xf32> to vector<512xf32>
    %174 = arith.mulf %66, %168 : vector<512xf32>
    %175 = arith.addf %173, %174 : vector<512xf32>
    %176 = math.tanh %175 : vector<512xf32>
    %c13_78 = arith.constant 13 : index
    %c0_79 = arith.constant 0 : index
    %177 = vector.load %arg9[%c13_78, %c0_79] : memref<32x512xf32, #tpu.memory_space<vmem>>, vector<1x512xf32>
    %178 = vector.shape_cast %177 : vector<1x512xf32> to vector<512xf32>
    %179 = vector.shape_cast %176 : vector<512xf32> to vector<1x512xf32>
    tpu.vector_store %arg9[%c13_78, %c0_79], %179 {strides = array<i32>} : memref<32x512xf32, #tpu.memory_space<vmem>>, vector<1x512xf32>,
    %c14 = arith.constant 14 : index
    %c0_80 = arith.constant 0 : index
    %180 = vector.load %arg8[%c14, %c0_80] : memref<32x512xf32, #tpu.memory_space<vmem>>, vector<1x512xf32>
    %181 = vector.shape_cast %180 : vector<1x512xf32> to vector<512xf32>
    %182 = arith.mulf %66, %176 : vector<512xf32>
    %183 = arith.addf %181, %182 : vector<512xf32>
    %184 = math.tanh %183 : vector<512xf32>
    %c14_81 = arith.constant 14 : index
    %c0_82 = arith.constant 0 : index
    %185 = vector.load %arg9[%c14_81, %c0_82] : memref<32x512xf32, #tpu.memory_space<vmem>>, vector<1x512xf32>
    %186 = vector.shape_cast %185 : vector<1x512xf32> to vector<512xf32>
    %187 = vector.shape_cast %184 : vector<512xf32> to vector<1x512xf32>
    tpu.vector_store %arg9[%c14_81, %c0_82], %187 {strides = array<i32>} : memref<32x512xf32, #tpu.memory_space<vmem>>, vector<1x512xf32>,
    %c15 = arith.constant 15 : index
    %c0_83 = arith.constant 0 : index
    %188 = vector.load %arg8[%c15, %c0_83] : memref<32x512xf32, #tpu.memory_space<vmem>>, vector<1x512xf32>
    %189 = vector.shape_cast %188 : vector<1x512xf32> to vector<512xf32>
    %190 = arith.mulf %66, %184 : vector<512xf32>
    %191 = arith.addf %189, %190 : vector<512xf32>
    %192 = math.tanh %191 : vector<512xf32>
    %c15_84 = arith.constant 15 : index
    %c0_85 = arith.constant 0 : index
    %193 = vector.load %arg9[%c15_84, %c0_85] : memref<32x512xf32, #tpu.memory_space<vmem>>, vector<1x512xf32>
    %194 = vector.shape_cast %193 : vector<1x512xf32> to vector<512xf32>
    %195 = vector.shape_cast %192 : vector<512xf32> to vector<1x512xf32>
    tpu.vector_store %arg9[%c15_84, %c0_85], %195 {strides = array<i32>} : memref<32x512xf32, #tpu.memory_space<vmem>>, vector<1x512xf32>,
    %c16 = arith.constant 16 : index
    %c0_86 = arith.constant 0 : index
    %196 = vector.load %arg8[%c16, %c0_86] : memref<32x512xf32, #tpu.memory_space<vmem>>, vector<1x512xf32>
    %197 = vector.shape_cast %196 : vector<1x512xf32> to vector<512xf32>
    %198 = arith.mulf %66, %192 : vector<512xf32>
    %199 = arith.addf %197, %198 : vector<512xf32>
    %200 = math.tanh %199 : vector<512xf32>
    %c16_87 = arith.constant 16 : index
    %c0_88 = arith.constant 0 : index
    %201 = vector.load %arg9[%c16_87, %c0_88] : memref<32x512xf32, #tpu.memory_space<vmem>>, vector<1x512xf32>
    %202 = vector.shape_cast %201 : vector<1x512xf32> to vector<512xf32>
    %203 = vector.shape_cast %200 : vector<512xf32> to vector<1x512xf32>
    tpu.vector_store %arg9[%c16_87, %c0_88], %203 {strides = array<i32>} : memref<32x512xf32, #tpu.memory_space<vmem>>, vector<1x512xf32>,
    %c17 = arith.constant 17 : index
    %c0_89 = arith.constant 0 : index
    %204 = vector.load %arg8[%c17, %c0_89] : memref<32x512xf32, #tpu.memory_space<vmem>>, vector<1x512xf32>
    %205 = vector.shape_cast %204 : vector<1x512xf32> to vector<512xf32>
    %206 = arith.mulf %66, %200 : vector<512xf32>
    %207 = arith.addf %205, %206 : vector<512xf32>
    %208 = math.tanh %207 : vector<512xf32>
    %c17_90 = arith.constant 17 : index
    %c0_91 = arith.constant 0 : index
    %209 = vector.load %arg9[%c17_90, %c0_91] : memref<32x512xf32, #tpu.memory_space<vmem>>, vector<1x512xf32>
    %210 = vector.shape_cast %209 : vector<1x512xf32> to vector<512xf32>
    %211 = vector.shape_cast %208 : vector<512xf32> to vector<1x512xf32>
    tpu.vector_store %arg9[%c17_90, %c0_91], %211 {strides = array<i32>} : memref<32x512xf32, #tpu.memory_space<vmem>>, vector<1x512xf32>,
    %c18 = arith.constant 18 : index
    %c0_92 = arith.constant 0 : index
    %212 = vector.load %arg8[%c18, %c0_92] : memref<32x512xf32, #tpu.memory_space<vmem>>, vector<1x512xf32>
    %213 = vector.shape_cast %212 : vector<1x512xf32> to vector<512xf32>
    %214 = arith.mulf %66, %208 : vector<512xf32>
    %215 = arith.addf %213, %214 : vector<512xf32>
    %216 = math.tanh %215 : vector<512xf32>
    %c18_93 = arith.constant 18 : index
    %c0_94 = arith.constant 0 : index
    %217 = vector.load %arg9[%c18_93, %c0_94] : memref<32x512xf32, #tpu.memory_space<vmem>>, vector<1x512xf32>
    %218 = vector.shape_cast %217 : vector<1x512xf32> to vector<512xf32>
    %219 = vector.shape_cast %216 : vector<512xf32> to vector<1x512xf32>
    tpu.vector_store %arg9[%c18_93, %c0_94], %219 {strides = array<i32>} : memref<32x512xf32, #tpu.memory_space<vmem>>, vector<1x512xf32>,
    %c19 = arith.constant 19 : index
    %c0_95 = arith.constant 0 : index
    %220 = vector.load %arg8[%c19, %c0_95] : memref<32x512xf32, #tpu.memory_space<vmem>>, vector<1x512xf32>
    %221 = vector.shape_cast %220 : vector<1x512xf32> to vector<512xf32>
    %222 = arith.mulf %66, %216 : vector<512xf32>
    %223 = arith.addf %221, %222 : vector<512xf32>
    %224 = math.tanh %223 : vector<512xf32>
    %c19_96 = arith.constant 19 : index
    %c0_97 = arith.constant 0 : index
    %225 = vector.load %arg9[%c19_96, %c0_97] : memref<32x512xf32, #tpu.memory_space<vmem>>, vector<1x512xf32>
    %226 = vector.shape_cast %225 : vector<1x512xf32> to vector<512xf32>
    %227 = vector.shape_cast %224 : vector<512xf32> to vector<1x512xf32>
    tpu.vector_store %arg9[%c19_96, %c0_97], %227 {strides = array<i32>} : memref<32x512xf32, #tpu.memory_space<vmem>>, vector<1x512xf32>,
    %c20 = arith.constant 20 : index
    %c0_98 = arith.constant 0 : index
    %228 = vector.load %arg8[%c20, %c0_98] : memref<32x512xf32, #tpu.memory_space<vmem>>, vector<1x512xf32>
    %229 = vector.shape_cast %228 : vector<1x512xf32> to vector<512xf32>
    %230 = arith.mulf %66, %224 : vector<512xf32>
    %231 = arith.addf %229, %230 : vector<512xf32>
    %232 = math.tanh %231 : vector<512xf32>
    %c20_99 = arith.constant 20 : index
    %c0_100 = arith.constant 0 : index
    %233 = vector.load %arg9[%c20_99, %c0_100] : memref<32x512xf32, #tpu.memory_space<vmem>>, vector<1x512xf32>
    %234 = vector.shape_cast %233 : vector<1x512xf32> to vector<512xf32>
    %235 = vector.shape_cast %232 : vector<512xf32> to vector<1x512xf32>
    tpu.vector_store %arg9[%c20_99, %c0_100], %235 {strides = array<i32>} : memref<32x512xf32, #tpu.memory_space<vmem>>, vector<1x512xf32>,
    %c21 = arith.constant 21 : index
    %c0_101 = arith.constant 0 : index
    %236 = vector.load %arg8[%c21, %c0_101] : memref<32x512xf32, #tpu.memory_space<vmem>>, vector<1x512xf32>
    %237 = vector.shape_cast %236 : vector<1x512xf32> to vector<512xf32>
    %238 = arith.mulf %66, %232 : vector<512xf32>
    %239 = arith.addf %237, %238 : vector<512xf32>
    %240 = math.tanh %239 : vector<512xf32>
    %c21_102 = arith.constant 21 : index
    %c0_103 = arith.constant 0 : index
    %241 = vector.load %arg9[%c21_102, %c0_103] : memref<32x512xf32, #tpu.memory_space<vmem>>, vector<1x512xf32>
    %242 = vector.shape_cast %241 : vector<1x512xf32> to vector<512xf32>
    %243 = vector.shape_cast %240 : vector<512xf32> to vector<1x512xf32>
    tpu.vector_store %arg9[%c21_102, %c0_103], %243 {strides = array<i32>} : memref<32x512xf32, #tpu.memory_space<vmem>>, vector<1x512xf32>,
    %c22 = arith.constant 22 : index
    %c0_104 = arith.constant 0 : index
    %244 = vector.load %arg8[%c22, %c0_104] : memref<32x512xf32, #tpu.memory_space<vmem>>, vector<1x512xf32>
    %245 = vector.shape_cast %244 : vector<1x512xf32> to vector<512xf32>
    %246 = arith.mulf %66, %240 : vector<512xf32>
    %247 = arith.addf %245, %246 : vector<512xf32>
    %248 = math.tanh %247 : vector<512xf32>
    %c22_105 = arith.constant 22 : index
    %c0_106 = arith.constant 0 : index
    %249 = vector.load %arg9[%c22_105, %c0_106] : memref<32x512xf32, #tpu.memory_space<vmem>>, vector<1x512xf32>
    %250 = vector.shape_cast %249 : vector<1x512xf32> to vector<512xf32>
    %251 = vector.shape_cast %248 : vector<512xf32> to vector<1x512xf32>
    tpu.vector_store %arg9[%c22_105, %c0_106], %251 {strides = array<i32>} : memref<32x512xf32, #tpu.memory_space<vmem>>, vector<1x512xf32>,
    %c23 = arith.constant 23 : index
    %c0_107 = arith.constant 0 : index
    %252 = vector.load %arg8[%c23, %c0_107] : memref<32x512xf32, #tpu.memory_space<vmem>>, vector<1x512xf32>
    %253 = vector.shape_cast %252 : vector<1x512xf32> to vector<512xf32>
    %254 = arith.mulf %66, %248 : vector<512xf32>
    %255 = arith.addf %253, %254 : vector<512xf32>
    %256 = math.tanh %255 : vector<512xf32>
    %c23_108 = arith.constant 23 : index
    %c0_109 = arith.constant 0 : index
    %257 = vector.load %arg9[%c23_108, %c0_109] : memref<32x512xf32, #tpu.memory_space<vmem>>, vector<1x512xf32>
    %258 = vector.shape_cast %257 : vector<1x512xf32> to vector<512xf32>
    %259 = vector.shape_cast %256 : vector<512xf32> to vector<1x512xf32>
    tpu.vector_store %arg9[%c23_108, %c0_109], %259 {strides = array<i32>} : memref<32x512xf32, #tpu.memory_space<vmem>>, vector<1x512xf32>,
    %c24 = arith.constant 24 : index
    %c0_110 = arith.constant 0 : index
    %260 = vector.load %arg8[%c24, %c0_110] : memref<32x512xf32, #tpu.memory_space<vmem>>, vector<1x512xf32>
    %261 = vector.shape_cast %260 : vector<1x512xf32> to vector<512xf32>
    %262 = arith.mulf %66, %256 : vector<512xf32>
    %263 = arith.addf %261, %262 : vector<512xf32>
    %264 = math.tanh %263 : vector<512xf32>
    %c24_111 = arith.constant 24 : index
    %c0_112 = arith.constant 0 : index
    %265 = vector.load %arg9[%c24_111, %c0_112] : memref<32x512xf32, #tpu.memory_space<vmem>>, vector<1x512xf32>
    %266 = vector.shape_cast %265 : vector<1x512xf32> to vector<512xf32>
    %267 = vector.shape_cast %264 : vector<512xf32> to vector<1x512xf32>
    tpu.vector_store %arg9[%c24_111, %c0_112], %267 {strides = array<i32>} : memref<32x512xf32, #tpu.memory_space<vmem>>, vector<1x512xf32>,
    %c25 = arith.constant 25 : index
    %c0_113 = arith.constant 0 : index
    %268 = vector.load %arg8[%c25, %c0_113] : memref<32x512xf32, #tpu.memory_space<vmem>>, vector<1x512xf32>
    %269 = vector.shape_cast %268 : vector<1x512xf32> to vector<512xf32>
    %270 = arith.mulf %66, %264 : vector<512xf32>
    %271 = arith.addf %269, %270 : vector<512xf32>
    %272 = math.tanh %271 : vector<512xf32>
    %c25_114 = arith.constant 25 : index
    %c0_115 = arith.constant 0 : index
    %273 = vector.load %arg9[%c25_114, %c0_115] : memref<32x512xf32, #tpu.memory_space<vmem>>, vector<1x512xf32>
    %274 = vector.shape_cast %273 : vector<1x512xf32> to vector<512xf32>
    %275 = vector.shape_cast %272 : vector<512xf32> to vector<1x512xf32>
    tpu.vector_store %arg9[%c25_114, %c0_115], %275 {strides = array<i32>} : memref<32x512xf32, #tpu.memory_space<vmem>>, vector<1x512xf32>,
    %c26 = arith.constant 26 : index
    %c0_116 = arith.constant 0 : index
    %276 = vector.load %arg8[%c26, %c0_116] : memref<32x512xf32, #tpu.memory_space<vmem>>, vector<1x512xf32>
    %277 = vector.shape_cast %276 : vector<1x512xf32> to vector<512xf32>
    %278 = arith.mulf %66, %272 : vector<512xf32>
    %279 = arith.addf %277, %278 : vector<512xf32>
    %280 = math.tanh %279 : vector<512xf32>
    %c26_117 = arith.constant 26 : index
    %c0_118 = arith.constant 0 : index
    %281 = vector.load %arg9[%c26_117, %c0_118] : memref<32x512xf32, #tpu.memory_space<vmem>>, vector<1x512xf32>
    %282 = vector.shape_cast %281 : vector<1x512xf32> to vector<512xf32>
    %283 = vector.shape_cast %280 : vector<512xf32> to vector<1x512xf32>
    tpu.vector_store %arg9[%c26_117, %c0_118], %283 {strides = array<i32>} : memref<32x512xf32, #tpu.memory_space<vmem>>, vector<1x512xf32>,
    %c27 = arith.constant 27 : index
    %c0_119 = arith.constant 0 : index
    %284 = vector.load %arg8[%c27, %c0_119] : memref<32x512xf32, #tpu.memory_space<vmem>>, vector<1x512xf32>
    %285 = vector.shape_cast %284 : vector<1x512xf32> to vector<512xf32>
    %286 = arith.mulf %66, %280 : vector<512xf32>
    %287 = arith.addf %285, %286 : vector<512xf32>
    %288 = math.tanh %287 : vector<512xf32>
    %c27_120 = arith.constant 27 : index
    %c0_121 = arith.constant 0 : index
    %289 = vector.load %arg9[%c27_120, %c0_121] : memref<32x512xf32, #tpu.memory_space<vmem>>, vector<1x512xf32>
    %290 = vector.shape_cast %289 : vector<1x512xf32> to vector<512xf32>
    %291 = vector.shape_cast %288 : vector<512xf32> to vector<1x512xf32>
    tpu.vector_store %arg9[%c27_120, %c0_121], %291 {strides = array<i32>} : memref<32x512xf32, #tpu.memory_space<vmem>>, vector<1x512xf32>,
    %c28 = arith.constant 28 : index
    %c0_122 = arith.constant 0 : index
    %292 = vector.load %arg8[%c28, %c0_122] : memref<32x512xf32, #tpu.memory_space<vmem>>, vector<1x512xf32>
    %293 = vector.shape_cast %292 : vector<1x512xf32> to vector<512xf32>
    %294 = arith.mulf %66, %288 : vector<512xf32>
    %295 = arith.addf %293, %294 : vector<512xf32>
    %296 = math.tanh %295 : vector<512xf32>
    %c28_123 = arith.constant 28 : index
    %c0_124 = arith.constant 0 : index
    %297 = vector.load %arg9[%c28_123, %c0_124] : memref<32x512xf32, #tpu.memory_space<vmem>>, vector<1x512xf32>
    %298 = vector.shape_cast %297 : vector<1x512xf32> to vector<512xf32>
    %299 = vector.shape_cast %296 : vector<512xf32> to vector<1x512xf32>
    tpu.vector_store %arg9[%c28_123, %c0_124], %299 {strides = array<i32>} : memref<32x512xf32, #tpu.memory_space<vmem>>, vector<1x512xf32>,
    %c29 = arith.constant 29 : index
    %c0_125 = arith.constant 0 : index
    %300 = vector.load %arg8[%c29, %c0_125] : memref<32x512xf32, #tpu.memory_space<vmem>>, vector<1x512xf32>
    %301 = vector.shape_cast %300 : vector<1x512xf32> to vector<512xf32>
    %302 = arith.mulf %66, %296 : vector<512xf32>
    %303 = arith.addf %301, %302 : vector<512xf32>
    %304 = math.tanh %303 : vector<512xf32>
    %c29_126 = arith.constant 29 : index
    %c0_127 = arith.constant 0 : index
    %305 = vector.load %arg9[%c29_126, %c0_127] : memref<32x512xf32, #tpu.memory_space<vmem>>, vector<1x512xf32>
    %306 = vector.shape_cast %305 : vector<1x512xf32> to vector<512xf32>
    %307 = vector.shape_cast %304 : vector<512xf32> to vector<1x512xf32>
    tpu.vector_store %arg9[%c29_126, %c0_127], %307 {strides = array<i32>} : memref<32x512xf32, #tpu.memory_space<vmem>>, vector<1x512xf32>,
    %c30 = arith.constant 30 : index
    %c0_128 = arith.constant 0 : index
    %308 = vector.load %arg8[%c30, %c0_128] : memref<32x512xf32, #tpu.memory_space<vmem>>, vector<1x512xf32>
    %309 = vector.shape_cast %308 : vector<1x512xf32> to vector<512xf32>
    %310 = arith.mulf %66, %304 : vector<512xf32>
    %311 = arith.addf %309, %310 : vector<512xf32>
    %312 = math.tanh %311 : vector<512xf32>
    %c30_129 = arith.constant 30 : index
    %c0_130 = arith.constant 0 : index
    %313 = vector.load %arg9[%c30_129, %c0_130] : memref<32x512xf32, #tpu.memory_space<vmem>>, vector<1x512xf32>
    %314 = vector.shape_cast %313 : vector<1x512xf32> to vector<512xf32>
    %315 = vector.shape_cast %312 : vector<512xf32> to vector<1x512xf32>
    tpu.vector_store %arg9[%c30_129, %c0_130], %315 {strides = array<i32>} : memref<32x512xf32, #tpu.memory_space<vmem>>, vector<1x512xf32>,
    %c31 = arith.constant 31 : index
    %c0_131 = arith.constant 0 : index
    %316 = vector.load %arg8[%c31, %c0_131] : memref<32x512xf32, #tpu.memory_space<vmem>>, vector<1x512xf32>
    %317 = vector.shape_cast %316 : vector<1x512xf32> to vector<512xf32>
    %318 = arith.mulf %66, %312 : vector<512xf32>
    %319 = arith.addf %317, %318 : vector<512xf32>
    %320 = math.tanh %319 : vector<512xf32>
    %c31_132 = arith.constant 31 : index
    %c0_133 = arith.constant 0 : index
    %321 = vector.load %arg9[%c31_132, %c0_133] : memref<32x512xf32, #tpu.memory_space<vmem>>, vector<1x512xf32>
    %322 = vector.shape_cast %321 : vector<1x512xf32> to vector<512xf32>
    %323 = vector.shape_cast %320 : vector<512xf32> to vector<1x512xf32>
    tpu.vector_store %arg9[%c31_132, %c0_133], %323 {strides = array<i32>} : memref<32x512xf32, #tpu.memory_space<vmem>>, vector<1x512xf32>,
    %c0_134 = arith.constant 0 : index
    %c0_135 = arith.constant 0 : index
    %324 = vector.load %arg5[%c0_134, %c0_135] : memref<1x32xf32, #tpu.memory_space<vmem>>, vector<1x32xf32>
    %c0_136 = arith.constant 0 : index
    %c0_137 = arith.constant 0 : index
    %325 = vector.load %arg9[%c0_136, %c0_137] : memref<32x512xf32, #tpu.memory_space<vmem>>, vector<32x512xf32>
    %cst_138 = arith.constant dense<0.000000e+00> : vector<1x512xf32>
    %326 = tpu.matmul %324, %325, %cst_138 {dimension_numbers = #tpu.dot_dimension_numbers<[1], [0], [0], [1], [0, 0, 1, 1], [], []>} : vector<1x32xf32>, vector<32x512xf32>, vector<1x512xf32> -> vector<1x512xf32>
    %327 = vector.shape_cast %326 : vector<1x512xf32> to vector<512xf32>
    %c0_139 = arith.constant 0 : index
    %c0_140 = arith.constant 0 : index
    %328 = memref.load %arg6[%c0_139, %c0_140] : memref<1x1xf32, #tpu.memory_space<smem>>
    %329 = vector.broadcast %328 : f32 to vector<512xf32>
    %330 = arith.addf %327, %329 : vector<512xf32>
    %cst_141 = arith.constant 0.000000e+00 : f32
    %331 = vector.broadcast %cst_141 : f32 to vector<512xf32>
    %332 = arith.subf %331, %330 : vector<512xf32>
    %333 = math.exp %332 : vector<512xf32>
    %cst_142 = arith.constant 1.000000e+00 : f32
    %334 = vector.broadcast %cst_142 : f32 to vector<512xf32>
    %335 = arith.addf %334, %333 : vector<512xf32>
    %cst_143 = arith.constant 1.000000e+00 : f32
    %336 = vector.broadcast %cst_143 : f32 to vector<512xf32>
    %337 = arith.divf %336, %335 : vector<512xf32>
    %c0_144 = arith.constant 0 : index
    %c0_145 = arith.constant 0 : index
    %338 = vector.load %arg7[%c0_144, %c0_145] : memref<1x512xf32, #tpu.memory_space<vmem>>, vector<1x512xf32>
    %339 = vector.shape_cast %338 : vector<1x512xf32> to vector<512xf32>
    %340 = vector.shape_cast %337 : vector<512xf32> to vector<1x512xf32>
    tpu.vector_store %arg7[%c0_144, %c0_145], %340 {strides = array<i32>} : memref<1x512xf32, #tpu.memory_space<vmem>>, vector<1x512xf32>,
    return
  }
  func.func @transform_0(%arg0: i32) -> (i32, i32) {
    %c0_i32 = arith.constant 0 : i32
    %c0_i32_0 = arith.constant 0 : i32
    return %c0_i32, %arg0 : i32, i32
  }
  func.func @transform_1(%arg0: i32) -> (i32, i32) {
    %c0_i32 = arith.constant 0 : i32
    %c0_i32_0 = arith.constant 0 : i32
    %c0_i32_1 = arith.constant 0 : i32
    return %c0_i32, %c0_i32_0 : i32, i32
  }
  func.func @transform_2(%arg0: i32) -> (i32, i32) {
    %c0_i32 = arith.constant 0 : i32
    %c0_i32_0 = arith.constant 0 : i32
    %c0_i32_1 = arith.constant 0 : i32
    return %c0_i32, %c0_i32_0 : i32, i32
  }
  func.func @transform_3(%arg0: i32) -> (i32, i32) {
    %c0_i32 = arith.constant 0 : i32
    %c0_i32_0 = arith.constant 0 : i32
    %c0_i32_1 = arith.constant 0 : i32
    return %c0_i32, %c0_i32_0 : i32, i32
  }
  func.func @transform_4(%arg0: i32) -> (i32, i32) {
    %c0_i32 = arith.constant 0 : i32
    %c0_i32_0 = arith.constant 0 : i32
    %c0_i32_1 = arith.constant 0 : i32
    return %c0_i32, %c0_i32_0 : i32, i32
  }
  func.func @transform_5(%arg0: i32) -> (i32, i32) {
    %c0_i32 = arith.constant 0 : i32
    %c0_i32_0 = arith.constant 0 : i32
    %c0_i32_1 = arith.constant 0 : i32
    return %c0_i32, %c0_i32_0 : i32, i32
  }
  func.func @transform_6(%arg0: i32) -> (i32, i32) {
    %c0_i32 = arith.constant 0 : i32
    %c0_i32_0 = arith.constant 0 : i32
    return %c0_i32, %arg0 : i32, i32
  }
}

</mosaic_0001>

<llo_original>
// kernel: tpu_custom_call.1
$region0: #{tpu_custom_call.1}
  #allocation0 [shape = 'u32[]', space=smem, size = 0x4, offset = 0x4, fixed_abs, tag = 'smem constant byte address 0x4 - core index']
  #allocation1 [shape = 'u32[144,128]{1,0:T(1,128)}', space=vmem, size = 0x12000, scoped, tag = 'internal scratch']
  #allocation2 [shape = 'f32[32,512]{1,0:T(8,128)}', space=vmem, size = 0x10000, scoped, tag = 'scratch operand']
  #allocation3 [shape = 'f32[32,512]{1,0:T(8,128)}', space=vmem, size = 0x10000, scoped, tag = 'scratch operand']
  #allocation4 [shape = 'f32[1,1]{1,0:T(1,128)S(6)}', space=smem, size = 0x200, scoped, tag = 'scoped memory for tpu_custom_call.1']
  #allocation5 [shape = 'f32[1,1]{1,0:T(1,128)S(6)}', space=smem, size = 0x200, scoped, tag = 'scoped memory for tpu_custom_call.1']
  %s0 = inlined_call_operand.hbm [shape: s32[6,512], index: 0, kind: input, shape index: {}]
  %s1 = inlined_call_operand.hbm [shape: f32[32,27], index: 1, kind: input, shape index: {}]
  %s2 = inlined_call_operand.vmem [shape: f32[1,6], index: 2, kind: input, shape index: {}]
  %s3 = inlined_call_operand.<no memory space> [shape: f32[1,1], index: 3, kind: input, shape index: {}]
  %s4 = inlined_call_operand.vmem [shape: f32[1,32], index: 4, kind: input, shape index: {}]
  %s5 = inlined_call_operand.<no memory space> [shape: f32[1,1], index: 5, kind: input, shape index: {}]
  %s6 = inlined_call_operand.hbm [shape: f32[1,512], index: 6, kind: output, shape index: {}]
  %s7 = sld [smem:[#allocation0]]
  $region46: #{tpu_custom_call.1} parent=0
    _
  %s9 = ssub.s32 1, %s7
  %s10 = scalar_select 0, %s9, %s7
  %11 = sst [smem:[#allocation4]] %s3
  %12 = sst [smem:[#allocation5]] %s5
  $region1: #{tpu_custom_call.1} parent=0
    #allocation6 [shape = 'u8[16384]{0}', space=vmem, size = 0x4000, scoped, tag = 'input window, operand 0, single buffered']
    #allocation7 [shape = 's32[1]{0}', space=sflag, size = 0x4, scoped, tag = 'scoped memory for tpu_custom_call.1']
    #allocation8 [shape = 's32[1]{0}', space=sflag, size = 0x4, scoped, tag = 'scoped memory for tpu_custom_call.1']
    #allocation9 [shape = 's32[1]{0}', space=sflag, size = 0x4, scoped, tag = 'scoped memory for tpu_custom_call.1']
    #allocation10 [shape = 'u8[16384]{0}', space=vmem, size = 0x4000, scoped, tag = 'input window, operand 1, single buffered']
    #allocation11 [shape = 's32[1]{0}', space=sflag, size = 0x4, scoped, tag = 'scoped memory for tpu_custom_call.1']
    #allocation12 [shape = 'u8[512]{0}', space=smem, size = 0x200, scoped, tag = 'input window, operand 2, single buffered']
    #allocation13 [shape = 'u8[2048]{0}', space=vmem, size = 0x800, scoped, tag = 'output window, operand 0, single buffered']
    %13 = vsyncpa [#allocation7], 0
    %14 = vsyncpa [#allocation11], 0
    %15 = vsyncpa [#allocation9], 0
    %16 = vsyncpa [#allocation8], 0
    // Predicated region
    $region2: #{tpu_custom_call.1} parent=1 // pred_check
      _
    $region3: #{tpu_custom_call.1} parent=1 // pred_check_branch
      %18 = sbr.rel (0) target = $region5
    $region4: #{tpu_custom_call.1} parent=1 // pred_region
      %s20 = ssub.s32 512, 512
      %21 = vsyncadd [#allocation7], %s20
      %s23 = sshll.u32 [#allocation6], 4
      %s24 = int_to_ptr.vmem [resolvable:$true] %s23
      %26 = dma.hbm_to_vmem [thread:$0]  %s0, 512, %s24, [#allocation7]
    $region5: #{tpu_custom_call.1} parent=1 // pred_fallthru
      _
    // Predicated region
    $region6: #{tpu_custom_call.1} parent=1 // pred_check
      _
    $region7: #{tpu_custom_call.1} parent=1 // pred_check_branch
      %28 = sbr.rel (0) target = $region9
    $region8: #{tpu_custom_call.1} parent=1 // pred_region
      %s30 = ssub.s32 512, 512
      %31 = vsyncadd [#allocation11], %s30
      %s32 = sshll.u32 [#allocation10], 4
      %s33 = int_to_ptr.vmem [resolvable:$true] %s32
      %38 = dma.hbm_to_vmem [thread:$0]  %s1, 512, %s33, [#allocation11], 128, 128, 8
    $region9: #{tpu_custom_call.1} parent=1 // pred_fallthru
      _
    // Predicated region
    $region10: #{tpu_custom_call.1} parent=1 // pred_check
      _
    $region11: #{tpu_custom_call.1} parent=1 // pred_check_branch
      %40 = sbr.rel (0) target = $region13
    $region12: #{tpu_custom_call.1} parent=1 // pred_region
      %s42 = ssub.s32 16, 16
      %43 = vsyncadd [#allocation9], %s42
      %s45 = sshll.u32 %s2, 4
      %s46 = int_to_ptr.vmem [resolvable:$true] %s45
      %48 = dma.vmem_to_smem %s46, 16, [#allocation12], [#allocation9]
    $region13: #{tpu_custom_call.1} parent=1 // pred_fallthru
      _
    // Predicated region
    $region14: #{tpu_custom_call.1} parent=1 // pred_check
      _
    $region15: #{tpu_custom_call.1} parent=1 // pred_check_branch
      %50 = sbr.rel (0) target = $region17
    $region16: #{tpu_custom_call.1} parent=1 // pred_region
      _
    $region17: #{tpu_custom_call.1} parent=1 // pred_fallthru
      _
    // Predicated region
    $region18: #{tpu_custom_call.1} parent=1 // pred_check
      _
    $region19: #{tpu_custom_call.1} parent=1 // pred_check_branch
      %52 = sbr.rel (0) target = $region21
    $region20: #{tpu_custom_call.1} parent=1 // pred_region
      _
    $region21: #{tpu_custom_call.1} parent=1 // pred_fallthru
      _
    // Predicated region
    $region22: #{tpu_custom_call.1} parent=1 // pred_check
      _
    $region23: #{tpu_custom_call.1} parent=1 // pred_check_branch
      %54 = sbr.rel (0) target = $region25
    $region24: #{tpu_custom_call.1} parent=1 // pred_region
      _
    $region25: #{tpu_custom_call.1} parent=1 // pred_fallthru
      _
    // Predicated region
    $region26: #{tpu_custom_call.1} parent=1 // pred_check
      _
    $region27: #{tpu_custom_call.1} parent=1 // pred_check_branch
      %56 = sbr.rel (0) target = $region29
    $region28: #{tpu_custom_call.1} parent=1 // pred_region
      %57 = dma.done [#allocation7], 512
    $region29: #{tpu_custom_call.1} parent=1 // pred_fallthru
      _
    // Predicated region
    $region30: #{tpu_custom_call.1} parent=1 // pred_check
      _
    $region31: #{tpu_custom_call.1} parent=1 // pred_check_branch
      %59 = sbr.rel (0) target = $region33
    $region32: #{tpu_custom_call.1} parent=1 // pred_region
      %60 = dma.done [#allocation11], 512
    $region33: #{tpu_custom_call.1} parent=1 // pred_fallthru
      _
    // Predicated region
    $region34: #{tpu_custom_call.1} parent=1 // pred_check
      _
    $region35: #{tpu_custom_call.1} parent=1 // pred_check_branch
      %62 = sbr.rel (0) target = $region37
    $region36: #{tpu_custom_call.1} parent=1 // pred_region
      %63 = dma.done [#allocation9], 16
    $region37: #{tpu_custom_call.1} parent=1 // pred_fallthru
      _
    %64 = sfence
    %v65 = vlaneseq
    %v66 = vshrl.u32 %v65, 7
    %v67 = vadd.s32 %v66, 8
    %v68 = vadd.s32 %v66, 16
    %v69 = vadd.s32 %v66, 24
    %v70 = vld [vmem:[#allocation6] ss:$8 sm:$0xf]
    %v71 = vlaneseq
    %v72 = vshrl.u32 %v71, 7
    %v73 = vsub.s32 0, %v72
    %v74 = vrot.slane %v70, %v73
    %v75 = vlaneseq
    %v76 = vshrl.u32 %v75, 7
    %v77 = vsub.s32 1, %v76
    %v78 = vrot.slane %v70, %v77
    %v79 = vlaneseq
    %v80 = vshrl.u32 %v79, 7
    %v81 = vsub.s32 2, %v80
    %v82 = vrot.slane %v70, %v81
    %v83 = vlaneseq
    %v84 = vshrl.u32 %v83, 7
    %v85 = vsub.s32 3, %v84
    %v86 = vrot.slane %v70, %v85
    %vm87 = vcmp.eq.s32.totalorder %v66, %v74
    %vm88 = vcmp.eq.s32.totalorder %v66, %v78
    %vm89 = vcmp.eq.s32.totalorder %v66, %v82
    %vm90 = vcmp.eq.s32.totalorder %v66, %v86
    %vm91 = vcmp.eq.s32.totalorder %v67, %v74
    %vm92 = vcmp.eq.s32.totalorder %v67, %v78
    %vm93 = vcmp.eq.s32.totalorder %v67, %v82
    %vm94 = vcmp.eq.s32.totalorder %v67, %v86
    %vm95 = vcmp.eq.s32.totalorder %v68, %v74
    %vm96 = vcmp.eq.s32.totalorder %v68, %v78
    %vm97 = vcmp.eq.s32.totalorder %v68, %v82
    %vm98 = vcmp.eq.s32.totalorder %v68, %v86
    %vm99 = vcmp.eq.s32.totalorder %v69, %v74
    %vm100 = vcmp.eq.s32.totalorder %v69, %v78
    %vm101 = vcmp.eq.s32.totalorder %v69, %v82
    %vm102 = vcmp.eq.s32.totalorder %v69, %v86
    %s103 = sld [smem:[#allocation12]]
    %v104 = vstv %s103
    %v105 = vsel %vm87, %v104, 0.0
    %v106 = vsel %vm88, %v104, 0.0
    %v107 = vsel %vm89, %v104, 0.0
    %v108 = vsel %vm90, %v104, 0.0
    %v109 = vsel %vm91, %v104, 0.0
    %v110 = vsel %vm92, %v104, 0.0
    %v111 = vsel %vm93, %v104, 0.0
    %v112 = vsel %vm94, %v104, 0.0
    %v113 = vsel %vm95, %v104, 0.0
    %v114 = vsel %vm96, %v104, 0.0
    %v115 = vsel %vm97, %v104, 0.0
    %v116 = vsel %vm98, %v104, 0.0
    %v117 = vsel %vm99, %v104, 0.0
    %v118 = vsel %vm100, %v104, 0.0
    %v119 = vsel %vm101, %v104, 0.0
    %v120 = vsel %vm102, %v104, 0.0
    %v121 = vadd.f32 %v105, 0.0
    %v122 = vadd.f32 %v106, 0.0
    %v123 = vadd.f32 %v107, 0.0
    %v124 = vadd.f32 %v108, 0.0
    %v125 = vadd.f32 %v109, 0.0
    %v126 = vadd.f32 %v110, 0.0
    %v127 = vadd.f32 %v111, 0.0
    %v128 = vadd.f32 %v112, 0.0
    %v129 = vadd.f32 %v113, 0.0
    %v130 = vadd.f32 %v114, 0.0
    %v131 = vadd.f32 %v115, 0.0
    %v132 = vadd.f32 %v116, 0.0
    %v133 = vadd.f32 %v117, 0.0
    %v134 = vadd.f32 %v118, 0.0
    %v135 = vadd.f32 %v119, 0.0
    %v136 = vadd.f32 %v120, 0.0
    %s137 = scalar_lea.vmem [#allocation6], 1
    %v138 = vld [vmem:[%s137] ss:$8 sm:$0xf]
    %v139 = vlaneseq
    %v140 = vshrl.u32 %v139, 7
    %v141 = vsub.s32 0, %v140
    %v142 = vrot.slane %v138, %v141
    %v143 = vlaneseq
    %v144 = vshrl.u32 %v143, 7
    %v145 = vsub.s32 1, %v144
    %v146 = vrot.slane %v138, %v145
    %v147 = vlaneseq
    %v148 = vshrl.u32 %v147, 7
    %v149 = vsub.s32 2, %v148
    %v150 = vrot.slane %v138, %v149
    %v151 = vlaneseq
    %v152 = vshrl.u32 %v151, 7
    %v153 = vsub.s32 3, %v152
    %v154 = vrot.slane %v138, %v153
    %vm155 = vcmp.eq.s32.totalorder %v66, %v142
    %vm156 = vcmp.eq.s32.totalorder %v66, %v146
    %vm157 = vcmp.eq.s32.totalorder %v66, %v150
    %vm158 = vcmp.eq.s32.totalorder %v66, %v154
    %vm159 = vcmp.eq.s32.totalorder %v67, %v142
    %vm160 = vcmp.eq.s32.totalorder %v67, %v146
    %vm161 = vcmp.eq.s32.totalorder %v67, %v150
    %vm162 = vcmp.eq.s32.totalorder %v67, %v154
    %vm163 = vcmp.eq.s32.totalorder %v68, %v142
    %vm164 = vcmp.eq.s32.totalorder %v68, %v146
    %vm165 = vcmp.eq.s32.totalorder %v68, %v150
    %vm166 = vcmp.eq.s32.totalorder %v68, %v154
    %vm167 = vcmp.eq.s32.totalorder %v69, %v142
    %vm168 = vcmp.eq.s32.totalorder %v69, %v146
    %vm169 = vcmp.eq.s32.totalorder %v69, %v150
    %vm170 = vcmp.eq.s32.totalorder %v69, %v154
    %s171 = sld [smem:[#allocation12 + $0x1]]
    %v172 = vstv %s171
    %v173 = vsel %vm155, %v172, 0.0
    %v174 = vsel %vm156, %v172, 0.0
    %v175 = vsel %vm157, %v172, 0.0
    %v176 = vsel %vm158, %v172, 0.0
    %v177 = vsel %vm159, %v172, 0.0
    %v178 = vsel %vm160, %v172, 0.0
    %v179 = vsel %vm161, %v172, 0.0
    %v180 = vsel %vm162, %v172, 0.0
    %v181 = vsel %vm163, %v172, 0.0
    %v182 = vsel %vm164, %v172, 0.0
    %v183 = vsel %vm165, %v172, 0.0
    %v184 = vsel %vm166, %v172, 0.0
    %v185 = vsel %vm167, %v172, 0.0
    %v186 = vsel %vm168, %v172, 0.0
    %v187 = vsel %vm169, %v172, 0.0
    %v188 = vsel %vm170, %v172, 0.0
    %v189 = vadd.f32 %v121, %v173
    %v190 = vadd.f32 %v122, %v174
    %v191 = vadd.f32 %v123, %v175
    %v192 = vadd.f32 %v124, %v176
    %v193 = vadd.f32 %v125, %v177
    %v194 = vadd.f32 %v126, %v178
    %v195 = vadd.f32 %v127, %v179
    %v196 = vadd.f32 %v128, %v180
    %v197 = vadd.f32 %v129, %v181
    %v198 = vadd.f32 %v130, %v182
    %v199 = vadd.f32 %v131, %v183
    %v200 = vadd.f32 %v132, %v184
    %v201 = vadd.f32 %v133, %v185
    %v202 = vadd.f32 %v134, %v186
    %v203 = vadd.f32 %v135, %v187
    %v204 = vadd.f32 %v136, %v188
    %s205 = scalar_lea.vmem [#allocation6], 2
    %v206 = vld [vmem:[%s205] ss:$8 sm:$0xf]
    %v207 = vlaneseq
    %v208 = vshrl.u32 %v207, 7
    %v209 = vsub.s32 0, %v208
    %v210 = vrot.slane %v206, %v209
    %v211 = vlaneseq
    %v212 = vshrl.u32 %v211, 7
    %v213 = vsub.s32 1, %v212
    %v214 = vrot.slane %v206, %v213
    %v215 = vlaneseq
    %v216 = vshrl.u32 %v215, 7
    %v217 = vsub.s32 2, %v216
    %v218 = vrot.slane %v206, %v217
    %v219 = vlaneseq
    %v220 = vshrl.u32 %v219, 7
    %v221 = vsub.s32 3, %v220
    %v222 = vrot.slane %v206, %v221
    %vm223 = vcmp.eq.s32.totalorder %v66, %v210
    %vm224 = vcmp.eq.s32.totalorder %v66, %v214
    %vm225 = vcmp.eq.s32.totalorder %v66, %v218
    %vm226 = vcmp.eq.s32.totalorder %v66, %v222
    %vm227 = vcmp.eq.s32.totalorder %v67, %v210
    %vm228 = vcmp.eq.s32.totalorder %v67, %v214
    %vm229 = vcmp.eq.s32.totalorder %v67, %v218
    %vm230 = vcmp.eq.s32.totalorder %v67, %v222
    %vm231 = vcmp.eq.s32.totalorder %v68, %v210
    %vm232 = vcmp.eq.s32.totalorder %v68, %v214
    %vm233 = vcmp.eq.s32.totalorder %v68, %v218
    %vm234 = vcmp.eq.s32.totalorder %v68, %v222
    %vm235 = vcmp.eq.s32.totalorder %v69, %v210
    %vm236 = vcmp.eq.s32.totalorder %v69, %v214
    %vm237 = vcmp.eq.s32.totalorder %v69, %v218
    %vm238 = vcmp.eq.s32.totalorder %v69, %v222
    %s239 = sld [smem:[#allocation12 + $0x2]]
    %v240 = vstv %s239
    %v241 = vsel %vm223, %v240, 0.0
    %v242 = vsel %vm224, %v240, 0.0
    %v243 = vsel %vm225, %v240, 0.0
    %v244 = vsel %vm226, %v240, 0.0
    %v245 = vsel %vm227, %v240, 0.0
    %v246 = vsel %vm228, %v240, 0.0
    %v247 = vsel %vm229, %v240, 0.0
    %v248 = vsel %vm230, %v240, 0.0
    %v249 = vsel %vm231, %v240, 0.0
    %v250 = vsel %vm232, %v240, 0.0
    %v251 = vsel %vm233, %v240, 0.0
    %v252 = vsel %vm234, %v240, 0.0
    %v253 = vsel %vm235, %v240, 0.0
    %v254 = vsel %vm236, %v240, 0.0
    %v255 = vsel %vm237, %v240, 0.0
    %v256 = vsel %vm238, %v240, 0.0
    %v257 = vadd.f32 %v189, %v241
    %v258 = vadd.f32 %v190, %v242
    %v259 = vadd.f32 %v191, %v243
    %v260 = vadd.f32 %v192, %v244
    %v261 = vadd.f32 %v193, %v245
    %v262 = vadd.f32 %v194, %v246
    %v263 = vadd.f32 %v195, %v247
    %v264 = vadd.f32 %v196, %v248
    %v265 = vadd.f32 %v197, %v249
    %v266 = vadd.f32 %v198, %v250
    %v267 = vadd.f32 %v199, %v251
    %v268 = vadd.f32 %v200, %v252
    %v269 = vadd.f32 %v201, %v253
    %v270 = vadd.f32 %v202, %v254
    %v271 = vadd.f32 %v203, %v255
    %v272 = vadd.f32 %v204, %v256
    %s273 = scalar_lea.vmem [#allocation6], 3
    %v274 = vld [vmem:[%s273] ss:$8 sm:$0xf]
    %v275 = vlaneseq
    %v276 = vshrl.u32 %v275, 7
    %v277 = vsub.s32 0, %v276
    %v278 = vrot.slane %v274, %v277
    %v279 = vlaneseq
    %v280 = vshrl.u32 %v279, 7
    %v281 = vsub.s32 1, %v280
    %v282 = vrot.slane %v274, %v281
    %v283 = vlaneseq
    %v284 = vshrl.u32 %v283, 7
    %v285 = vsub.s32 2, %v284
    %v286 = vrot.slane %v274, %v285
    %v287 = vlaneseq
    %v288 = vshrl.u32 %v287, 7
    %v289 = vsub.s32 3, %v288
    %v290 = vrot.slane %v274, %v289
    %vm291 = vcmp.eq.s32.totalorder %v66, %v278
    %vm292 = vcmp.eq.s32.totalorder %v66, %v282
    %vm293 = vcmp.eq.s32.totalorder %v66, %v286
    %vm294 = vcmp.eq.s32.totalorder %v66, %v290
    %vm295 = vcmp.eq.s32.totalorder %v67, %v278
    %vm296 = vcmp.eq.s32.totalorder %v67, %v282
    %vm297 = vcmp.eq.s32.totalorder %v67, %v286
    %vm298 = vcmp.eq.s32.totalorder %v67, %v290
    %vm299 = vcmp.eq.s32.totalorder %v68, %v278
    %vm300 = vcmp.eq.s32.totalorder %v68, %v282
    %vm301 = vcmp.eq.s32.totalorder %v68, %v286
    %vm302 = vcmp.eq.s32.totalorder %v68, %v290
    %vm303 = vcmp.eq.s32.totalorder %v69, %v278
    %vm304 = vcmp.eq.s32.totalorder %v69, %v282
    %vm305 = vcmp.eq.s32.totalorder %v69, %v286
    %vm306 = vcmp.eq.s32.totalorder %v69, %v290
    %s307 = sld [smem:[#allocation12 + $0x3]]
    %v308 = vstv %s307
    %v309 = vsel %vm291, %v308, 0.0
    %v310 = vsel %vm292, %v308, 0.0
    %v311 = vsel %vm293, %v308, 0.0
    %v312 = vsel %vm294, %v308, 0.0
    %v313 = vsel %vm295, %v308, 0.0
    %v314 = vsel %vm296, %v308, 0.0
    %v315 = vsel %vm297, %v308, 0.0
    %v316 = vsel %vm298, %v308, 0.0
    %v317 = vsel %vm299, %v308, 0.0
    %v318 = vsel %vm300, %v308, 0.0
    %v319 = vsel %vm301, %v308, 0.0
    %v320 = vsel %vm302, %v308, 0.0
    %v321 = vsel %vm303, %v308, 0.0
    %v322 = vsel %vm304, %v308, 0.0
    %v323 = vsel %vm305, %v308, 0.0
    %v324 = vsel %vm306, %v308, 0.0
    %v325 = vadd.f32 %v257, %v309
    %v326 = vadd.f32 %v258, %v310
    %v327 = vadd.f32 %v259, %v311
    %v328 = vadd.f32 %v260, %v312
    %v329 = vadd.f32 %v261, %v313
    %v330 = vadd.f32 %v262, %v314
    %v331 = vadd.f32 %v263, %v315
    %v332 = vadd.f32 %v264, %v316
    %v333 = vadd.f32 %v265, %v317
    %v334 = vadd.f32 %v266, %v318
    %v335 = vadd.f32 %v267, %v319
    %v336 = vadd.f32 %v268, %v320
    %v337 = vadd.f32 %v269, %v321
    %v338 = vadd.f32 %v270, %v322
    %v339 = vadd.f32 %v271, %v323
    %v340 = vadd.f32 %v272, %v324
    %s341 = scalar_lea.vmem [#allocation6], 4
    %v342 = vld [vmem:[%s341] ss:$8 sm:$0xf]
    %v343 = vlaneseq
    %v344 = vshrl.u32 %v343, 7
    %v345 = vsub.s32 0, %v344
    %v346 = vrot.slane %v342, %v345
    %v347 = vlaneseq
    %v348 = vshrl.u32 %v347, 7
    %v349 = vsub.s32 1, %v348
    %v350 = vrot.slane %v342, %v349
    %v351 = vlaneseq
    %v352 = vshrl.u32 %v351, 7
    %v353 = vsub.s32 2, %v352
    %v354 = vrot.slane %v342, %v353
    %v355 = vlaneseq
    %v356 = vshrl.u32 %v355, 7
    %v357 = vsub.s32 3, %v356
    %v358 = vrot.slane %v342, %v357
    %vm359 = vcmp.eq.s32.totalorder %v66, %v346
    %vm360 = vcmp.eq.s32.totalorder %v66, %v350
    %vm361 = vcmp.eq.s32.totalorder %v66, %v354
    %vm362 = vcmp.eq.s32.totalorder %v66, %v358
    %vm363 = vcmp.eq.s32.totalorder %v67, %v346
    %vm364 = vcmp.eq.s32.totalorder %v67, %v350
    %vm365 = vcmp.eq.s32.totalorder %v67, %v354
    %vm366 = vcmp.eq.s32.totalorder %v67, %v358
    %vm367 = vcmp.eq.s32.totalorder %v68, %v346
    %vm368 = vcmp.eq.s32.totalorder %v68, %v350
    %vm369 = vcmp.eq.s32.totalorder %v68, %v354
    %vm370 = vcmp.eq.s32.totalorder %v68, %v358
    %vm371 = vcmp.eq.s32.totalorder %v69, %v346
    %vm372 = vcmp.eq.s32.totalorder %v69, %v350
    %vm373 = vcmp.eq.s32.totalorder %v69, %v354
    %vm374 = vcmp.eq.s32.totalorder %v69, %v358
    %s375 = sld [smem:[#allocation12 + $0x4]]
    %v376 = vstv %s375
    %v377 = vsel %vm359, %v376, 0.0
    %v378 = vsel %vm360, %v376, 0.0
    %v379 = vsel %vm361, %v376, 0.0
    %v380 = vsel %vm362, %v376, 0.0
    %v381 = vsel %vm363, %v376, 0.0
    %v382 = vsel %vm364, %v376, 0.0
    %v383 = vsel %vm365, %v376, 0.0
    %v384 = vsel %vm366, %v376, 0.0
    %v385 = vsel %vm367, %v376, 0.0
    %v386 = vsel %vm368, %v376, 0.0
    %v387 = vsel %vm369, %v376, 0.0
    %v388 = vsel %vm370, %v376, 0.0
    %v389 = vsel %vm371, %v376, 0.0
    %v390 = vsel %vm372, %v376, 0.0
    %v391 = vsel %vm373, %v376, 0.0
    %v392 = vsel %vm374, %v376, 0.0
    %v393 = vadd.f32 %v325, %v377
    %v394 = vadd.f32 %v326, %v378
    %v395 = vadd.f32 %v327, %v379
    %v396 = vadd.f32 %v328, %v380
    %v397 = vadd.f32 %v329, %v381
    %v398 = vadd.f32 %v330, %v382
    %v399 = vadd.f32 %v331, %v383
    %v400 = vadd.f32 %v332, %v384
    %v401 = vadd.f32 %v333, %v385
    %v402 = vadd.f32 %v334, %v386
    %v403 = vadd.f32 %v335, %v387
    %v404 = vadd.f32 %v336, %v388
    %v405 = vadd.f32 %v337, %v389
    %v406 = vadd.f32 %v338, %v390
    %v407 = vadd.f32 %v339, %v391
    %v408 = vadd.f32 %v340, %v392
    %s409 = scalar_lea.vmem [#allocation6], 5
    %v410 = vld [vmem:[%s409] ss:$8 sm:$0xf]
    %v411 = vlaneseq
    %v412 = vshrl.u32 %v411, 7
    %v413 = vsub.s32 0, %v412
    %v414 = vrot.slane %v410, %v413
    %v415 = vlaneseq
    %v416 = vshrl.u32 %v415, 7
    %v417 = vsub.s32 1, %v416
    %v418 = vrot.slane %v410, %v417
    %v419 = vlaneseq
    %v420 = vshrl.u32 %v419, 7
    %v421 = vsub.s32 2, %v420
    %v422 = vrot.slane %v410, %v421
    %v423 = vlaneseq
    %v424 = vshrl.u32 %v423, 7
    %v425 = vsub.s32 3, %v424
    %v426 = vrot.slane %v410, %v425
    %vm427 = vcmp.eq.s32.totalorder %v66, %v414
    %vm428 = vcmp.eq.s32.totalorder %v66, %v418
    %vm429 = vcmp.eq.s32.totalorder %v66, %v422
    %vm430 = vcmp.eq.s32.totalorder %v66, %v426
    %vm431 = vcmp.eq.s32.totalorder %v67, %v414
    %vm432 = vcmp.eq.s32.totalorder %v67, %v418
    %vm433 = vcmp.eq.s32.totalorder %v67, %v422
    %vm434 = vcmp.eq.s32.totalorder %v67, %v426
    %vm435 = vcmp.eq.s32.totalorder %v68, %v414
    %vm436 = vcmp.eq.s32.totalorder %v68, %v418
    %vm437 = vcmp.eq.s32.totalorder %v68, %v422
    %vm438 = vcmp.eq.s32.totalorder %v68, %v426
    %vm439 = vcmp.eq.s32.totalorder %v69, %v414
    %vm440 = vcmp.eq.s32.totalorder %v69, %v418
    %vm441 = vcmp.eq.s32.totalorder %v69, %v422
    %vm442 = vcmp.eq.s32.totalorder %v69, %v426
    %s443 = sld [smem:[#allocation12 + $0x5]]
    %v444 = vstv %s443
    %v445 = vsel %vm427, %v444, 0.0
    %v446 = vsel %vm428, %v444, 0.0
    %v447 = vsel %vm429, %v444, 0.0
    %v448 = vsel %vm430, %v444, 0.0
    %v449 = vsel %vm431, %v444, 0.0
    %v450 = vsel %vm432, %v444, 0.0
    %v451 = vsel %vm433, %v444, 0.0
    %v452 = vsel %vm434, %v444, 0.0
    %v453 = vsel %vm435, %v444, 0.0
    %v454 = vsel %vm436, %v444, 0.0
    %v455 = vsel %vm437, %v444, 0.0
    %v456 = vsel %vm438, %v444, 0.0
    %v457 = vsel %vm439, %v444, 0.0
    %v458 = vsel %vm440, %v444, 0.0
    %v459 = vsel %vm441, %v444, 0.0
    %v460 = vsel %vm442, %v444, 0.0
    %v461 = vadd.f32 %v393, %v445
    %v462 = vadd.f32 %v394, %v446
    %v463 = vadd.f32 %v395, %v447
    %v464 = vadd.f32 %v396, %v448
    %v465 = vadd.f32 %v397, %v449
    %v466 = vadd.f32 %v398, %v450
    %v467 = vadd.f32 %v399, %v451
    %v468 = vadd.f32 %v400, %v452
    %v469 = vadd.f32 %v401, %v453
    %v470 = vadd.f32 %v402, %v454
    %v471 = vadd.f32 %v403, %v455
    %v472 = vadd.f32 %v404, %v456
    %v473 = vadd.f32 %v405, %v457
    %v474 = vadd.f32 %v406, %v458
    %v475 = vadd.f32 %v407, %v459
    %v476 = vadd.f32 %v408, %v460
    %v477 = vld [vmem:[#allocation10] sm:$0xff]
    %v478 = vld [vmem:[#allocation10 + $0x8] sm:$0xff]
    %v479 = vld [vmem:[#allocation10 + $0x10] sm:$0xff]
    %v480 = vld [vmem:[#allocation10 + $0x18] sm:$0xff]
    %vm481 = vcmask 220160
    %v483 = vsel %vm481, %v477, 0
    %v486 = vsel %vm481, %v478, 0
    %v489 = vsel %vm481, %v479, 0
    %v492 = vsel %vm481, %v480, 0
    %vm494 = vcmask 1042432
    %v496 = vsel %vm494, %v473, 0
    %v499 = vsel %vm494, %v474, 0
    %v502 = vsel %vm494, %v475, 0
    %v505 = vsel %vm494, %v476, 0
    %507 = vmatprep.subr.mxu0 %v462
    %508 = vmatpush1.msra.mxu0 %v461
    %509 = vmatprep.subr.mxu0 %v466
    %510 = vmatpush1.msra.mxu0 %v465
    %511 = vmatprep.subr.mxu0 %v470
    %512 = vmatpush1.msra.mxu0 %v469
    %513 = vmatprep.subr.mxu0 %v499
    %514 = vmatpush1.msra.mxu0 %v496
    %515 = vmatprep.subr.mxu0 0.0
    %516 = vmatpush1.msra.mxu0 0.0
    %517 = vmatprep.subr.mxu0 0.0
    %518 = vmatpush1.msra.mxu0 0.0
    %519 = vmatprep.subr.mxu0 0.0
    %520 = vmatpush1.msra.mxu0 0.0
    %521 = vmatprep.subr.mxu0 0.0
    %522 = vmatpush1.msra.mxu0 0.0
    %523 = vmatprep.subr.mxu0 0.0
    %524 = vmatpush1.msra.mxu0 0.0
    %525 = vmatprep.subr.mxu0 0.0
    %526 = vmatpush1.msra.mxu0 0.0
    %527 = vmatprep.subr.mxu0 0.0
    %528 = vmatpush1.msra.mxu0 0.0
    %529 = vmatprep.subr.mxu0 0.0
    %530 = vmatpush1.msra.mxu0 0.0
    %531 = vmatprep.subr.mxu0 0.0
    %532 = vmatpush1.msra.mxu0 0.0
    %533 = vmatprep.subr.mxu0 0.0
    %534 = vmatpush1.msra.mxu0 0.0
    %535 = vmatprep.subr.mxu0 0.0
    %536 = vmatpush1.msra.mxu0 0.0
    %537 = vmatprep.subr.mxu0 0.0
    %538 = vmatpush1.msra.mxu0 0.0
    %539 = vmatprep.subr.mxu0 0.0
    %540 = vmatpush1.msra.mxu0 0.0
    %541 = vmatprep.subr.mxu0 0.0
    %542 = vmatpush1.msra.mxu0 0.0
    %543 = vmatprep.subr.mxu0 0.0
    %544 = vmatpush1.msra.mxu0 0.0
    %545 = vmatprep.subr.mxu0 0.0
    %546 = vmatpush1.msra.mxu0 0.0
    %547 = vmatprep.subr.mxu0 0.0
    %548 = vmatpush1.msra.mxu0 0.0
    %549 = vmatprep.subr.mxu0 0.0
    %550 = vmatpush1.msra.mxu0 0.0
    %551 = vmatprep.subr.mxu0 0.0
    %552 = vmatpush1.msra.mxu0 0.0
    %553 = vmatprep.subr.mxu0 0.0
    %554 = vmatpush1.msra.mxu0 0.0
    %555 = vmatprep.subr.mxu0 0.0
    %556 = vmatpush1.msra.mxu0 0.0
    %557 = vmatprep.subr.mxu0 0.0
    %558 = vmatpush1.msra.mxu0 0.0
    %559 = vmatprep.subr.mxu0 0.0
    %560 = vmatpush1.msra.mxu0 0.0
    %561 = vmatprep.subr.mxu0 0.0
    %562 = vmatpush1.msra.mxu0 0.0
    %563 = vmatprep.subr.mxu0 0.0
    %564 = vmatpush1.msra.mxu0 0.0
    %565 = vmatprep.subr.mxu0 0.0
    %566 = vmatpush1.msra.mxu0 0.0
    %567 = vmatprep.subr.mxu0 0.0
    %568 = vmatpush1.msra.mxu0 0.0
    %569 = vmatprep.subr.mxu0 0.0
    %570 = vmatpush1.msra.mxu0 0.0
    %571 = vmatprep.mubr.f32.mxu0 0.0
    %572 = vmatmul.mubr.f32.gmra.mrb[0].mxu0 %v483
    %v573 = vpop.f32.mrb[0].mxu0
    %v574 = vadd.f32 0.0, %v573
    %v575 = vpop.f32.mrb[0].mxu0
    %v576 = vadd.f32 0.0, %v575
    %577 = vmatprep.mubr.f32.mxu0 0.0
    %578 = vmatmul.mubr.f32.gmra.mrb[0].mxu0 %v486
    %v579 = vpop.f32.mrb[0].mxu0
    %v580 = vadd.f32 0.0, %v579
    %v581 = vpop.f32.mrb[0].mxu0
    %v582 = vadd.f32 0.0, %v581
    %583 = vmatprep.mubr.f32.mxu0 0.0
    %584 = vmatmul.mubr.f32.gmra.mrb[0].mxu0 %v489
    %v585 = vpop.f32.mrb[0].mxu0
    %v586 = vadd.f32 0.0, %v585
    %v587 = vpop.f32.mrb[0].mxu0
    %v588 = vadd.f32 0.0, %v587
    %589 = vmatprep.mubr.f32.mxu0 0.0
    %590 = vmatmul.mubr.f32.gmra.mrb[0].mxu0 %v492
    %v591 = vpop.f32.mrb[0].mxu0
    %v592 = vadd.f32 0.0, %v591
    %v593 = vpop.f32.mrb[0].mxu0
    %v594 = vadd.f32 0.0, %v593
    %595 = vdwg.mxu0
    %596 = vmatprep.subr.mxu0 %v464
    %597 = vmatpush1.msra.mxu0 %v463
    %598 = vmatprep.subr.mxu0 %v468
    %599 = vmatpush1.msra.mxu0 %v467
    %600 = vmatprep.subr.mxu0 %v472
    %601 = vmatpush1.msra.mxu0 %v471
    %602 = vmatprep.subr.mxu0 %v505
    %603 = vmatpush1.msra.mxu0 %v502
    %604 = vmatprep.subr.mxu0 0.0
    %605 = vmatpush1.msra.mxu0 0.0
    %606 = vmatprep.subr.mxu0 0.0
    %607 = vmatpush1.msra.mxu0 0.0
    %608 = vmatprep.subr.mxu0 0.0
    %609 = vmatpush1.msra.mxu0 0.0
    %610 = vmatprep.subr.mxu0 0.0
    %611 = vmatpush1.msra.mxu0 0.0
    %612 = vmatprep.subr.mxu0 0.0
    %613 = vmatpush1.msra.mxu0 0.0
    %614 = vmatprep.subr.mxu0 0.0
    %615 = vmatpush1.msra.mxu0 0.0
    %616 = vmatprep.subr.mxu0 0.0
    %617 = vmatpush1.msra.mxu0 0.0
    %618 = vmatprep.subr.mxu0 0.0
    %619 = vmatpush1.msra.mxu0 0.0
    %620 = vmatprep.subr.mxu0 0.0
    %621 = vmatpush1.msra.mxu0 0.0
    %622 = vmatprep.subr.mxu0 0.0
    %623 = vmatpush1.msra.mxu0 0.0
    %624 = vmatprep.subr.mxu0 0.0
    %625 = vmatpush1.msra.mxu0 0.0
    %626 = vmatprep.subr.mxu0 0.0
    %627 = vmatpush1.msra.mxu0 0.0
    %628 = vmatprep.subr.mxu0 0.0
    %629 = vmatpush1.msra.mxu0 0.0
    %630 = vmatprep.subr.mxu0 0.0
    %631 = vmatpush1.msra.mxu0 0.0
    %632 = vmatprep.subr.mxu0 0.0
    %633 = vmatpush1.msra.mxu0 0.0
    %634 = vmatprep.subr.mxu0 0.0
    %635 = vmatpush1.msra.mxu0 0.0
    %636 = vmatprep.subr.mxu0 0.0
    %637 = vmatpush1.msra.mxu0 0.0
    %638 = vmatprep.subr.mxu0 0.0
    %639 = vmatpush1.msra.mxu0 0.0
    %640 = vmatprep.subr.mxu0 0.0
    %641 = vmatpush1.msra.mxu0 0.0
    %642 = vmatprep.subr.mxu0 0.0
    %643 = vmatpush1.msra.mxu0 0.0
    %644 = vmatprep.subr.mxu0 0.0
    %645 = vmatpush1.msra.mxu0 0.0
    %646 = vmatprep.subr.mxu0 0.0
    %647 = vmatpush1.msra.mxu0 0.0
    %648 = vmatprep.subr.mxu0 0.0
    %649 = vmatpush1.msra.mxu0 0.0
    %650 = vmatprep.subr.mxu0 0.0
    %651 = vmatpush1.msra.mxu0 0.0
    %652 = vmatprep.subr.mxu0 0.0
    %653 = vmatpush1.msra.mxu0 0.0
    %654 = vmatprep.subr.mxu0 0.0
    %655 = vmatpush1.msra.mxu0 0.0
    %656 = vmatprep.subr.mxu0 0.0
    %657 = vmatpush1.msra.mxu0 0.0
    %658 = vmatprep.subr.mxu0 0.0
    %659 = vmatpush1.msra.mxu0 0.0
    %660 = vmatprep.mubr.f32.mxu0 0.0
    %661 = vmatmul.mubr.f32.gmra.mrb[0].mxu0 %v483
    %v662 = vpop.f32.mrb[0].mxu0
    %v663 = vadd.f32 0.0, %v662
    %v664 = vpop.f32.mrb[0].mxu0
    %v665 = vadd.f32 0.0, %v664
    %666 = vmatprep.mubr.f32.mxu0 0.0
    %667 = vmatmul.mubr.f32.gmra.mrb[0].mxu0 %v486
    %v668 = vpop.f32.mrb[0].mxu0
    %v669 = vadd.f32 0.0, %v668
    %v670 = vpop.f32.mrb[0].mxu0
    %v671 = vadd.f32 0.0, %v670
    %672 = vmatprep.mubr.f32.mxu0 0.0
    %673 = vmatmul.mubr.f32.gmra.mrb[0].mxu0 %v489
    %v674 = vpop.f32.mrb[0].mxu0
    %v675 = vadd.f32 0.0, %v674
    %v676 = vpop.f32.mrb[0].mxu0
    %v677 = vadd.f32 0.0, %v676
    %678 = vmatprep.mubr.f32.mxu0 0.0
    %679 = vmatmul.mubr.f32.gmra.mrb[0].mxu0 %v492
    %v680 = vpop.f32.mrb[0].mxu0
    %v681 = vadd.f32 0.0, %v680
    %v682 = vpop.f32.mrb[0].mxu0
    %v683 = vadd.f32 0.0, %v682
    %684 = vdwg.mxu0
    %685 = vst [vmem:[#allocation2] sm:$0xff] %v574
    %686 = vst [vmem:[#allocation2 + $0x8] sm:$0xff] %v576
    %687 = vst [vmem:[#allocation2 + $0x10] sm:$0xff] %v663
    %688 = vst [vmem:[#allocation2 + $0x18] sm:$0xff] %v665
    %689 = vst [vmem:[#allocation2 + $0x20] sm:$0xff] %v580
    %690 = vst [vmem:[#allocation2 + $0x28] sm:$0xff] %v582
    %691 = vst [vmem:[#allocation2 + $0x30] sm:$0xff] %v669
    %692 = vst [vmem:[#allocation2 + $0x38] sm:$0xff] %v671
    %693 = vst [vmem:[#allocation2 + $0x40] sm:$0xff] %v586
    %694 = vst [vmem:[#allocation2 + $0x48] sm:$0xff] %v588
    %695 = vst [vmem:[#allocation2 + $0x50] sm:$0xff] %v675
    %696 = vst [vmem:[#allocation2 + $0x58] sm:$0xff] %v677
    %697 = vst [vmem:[#allocation2 + $0x60] sm:$0xff] %v592
    %698 = vst [vmem:[#allocation2 + $0x68] sm:$0xff] %v594
    %699 = vst [vmem:[#allocation2 + $0x70] sm:$0xff] %v681
    %700 = vst [vmem:[#allocation2 + $0x78] sm:$0xff] %v683
    %s701 = sld [smem:[#allocation4]]
    %v702 = vstv %s701
    %v703 = vld [vmem:[#allocation2] ss:$8 sm:$0xf]
    %v704 = vmul.f32 %v702, 0.0
    %v705 = vadd.f32 %v703, %v704
    %v706 = vtanh.pop %v705
    %v707 = vlaneseq
    %vm708 = vcmp.ge.s32.totalorder %v707, 0
    %vm709 = vcmp.lt.s32.totalorder %v707, 512
    %vm710 = vmand %vm708, %vm709
    %711 = vst.msk [vmem:[#allocation3] ss:$8 sm:$0xf] %vm710, %v706
    %712 = vst.msk [vmem:[#allocation3] ss:$8 sm:$0x0] %vm710, %v706
    %s713 = scalar_lea.vmem [#allocation2], 1
    %v714 = vld [vmem:[%s713] ss:$8 sm:$0xf]
    %v715 = vmul.f32 %v702, %v706
    %v716 = vadd.f32 %v714, %v715
    %v717 = vtanh.pop %v716
    %s718 = scalar_lea.vmem [#allocation3], 1
    %719 = vst.msk [vmem:[%s718] ss:$8 sm:$0xf] %vm710, %v717
    %720 = vst.msk [vmem:[%s718] ss:$8 sm:$0x0] %vm710, %v717
    %s721 = scalar_lea.vmem [#allocation2], 2
    %v722 = vld [vmem:[%s721] ss:$8 sm:$0xf]
    %v723 = vmul.f32 %v702, %v717
    %v724 = vadd.f32 %v722, %v723
    %v725 = vtanh.pop %v724
    %s726 = scalar_lea.vmem [#allocation3], 2
    %727 = vst.msk [vmem:[%s726] ss:$8 sm:$0xf] %vm710, %v725
    %728 = vst.msk [vmem:[%s726] ss:$8 sm:$0x0] %vm710, %v725
    %s729 = scalar_lea.vmem [#allocation2], 3
    %v730 = vld [vmem:[%s729] ss:$8 sm:$0xf]
    %v731 = vmul.f32 %v702, %v725
    %v732 = vadd.f32 %v730, %v731
    %v733 = vtanh.pop %v732
    %s734 = scalar_lea.vmem [#allocation3], 3
    %735 = vst.msk [vmem:[%s734] ss:$8 sm:$0xf] %vm710, %v733
    %736 = vst.msk [vmem:[%s734] ss:$8 sm:$0x0] %vm710, %v733
    %s737 = scalar_lea.vmem [#allocation2], 4
    %v738 = vld [vmem:[%s737] ss:$8 sm:$0xf]
    %v739 = vmul.f32 %v702, %v733
    %v740 = vadd.f32 %v738, %v739
    %v741 = vtanh.pop %v740
    %s742 = scalar_lea.vmem [#allocation3], 4
    %743 = vst.msk [vmem:[%s742] ss:$8 sm:$0xf] %vm710, %v741
    %744 = vst.msk [vmem:[%s742] ss:$8 sm:$0x0] %vm710, %v741
    %s745 = scalar_lea.vmem [#allocation2], 5
    %v746 = vld [vmem:[%s745] ss:$8 sm:$0xf]
    %v747 = vmul.f32 %v702, %v741
    %v748 = vadd.f32 %v746, %v747
    %v749 = vtanh.pop %v748
    %s750 = scalar_lea.vmem [#allocation3], 5
    %751 = vst.msk [vmem:[%s750] ss:$8 sm:$0xf] %vm710, %v749
    %752 = vst.msk [vmem:[%s750] ss:$8 sm:$0x0] %vm710, %v749
    %s753 = scalar_lea.vmem [#allocation2], 6
    %v754 = vld [vmem:[%s753] ss:$8 sm:$0xf]
    %v755 = vmul.f32 %v702, %v749
    %v756 = vadd.f32 %v754, %v755
    %v757 = vtanh.pop %v756
    %s758 = scalar_lea.vmem [#allocation3], 6
    %759 = vst.msk [vmem:[%s758] ss:$8 sm:$0xf] %vm710, %v757
    %760 = vst.msk [vmem:[%s758] ss:$8 sm:$0x0] %vm710, %v757
    %s761 = scalar_lea.vmem [#allocation2], 7
    %v762 = vld [vmem:[%s761] ss:$8 sm:$0xf]
    %v763 = vmul.f32 %v702, %v757
    %v764 = vadd.f32 %v762, %v763
    %v765 = vtanh.pop %v764
    %s766 = scalar_lea.vmem [#allocation3], 7
    %767 = vst.msk [vmem:[%s766] ss:$8 sm:$0xf] %vm710, %v765
    %768 = vst.msk [vmem:[%s766] ss:$8 sm:$0x0] %vm710, %v765
    %s769 = scalar_lea.vmem [#allocation2], 32
    %v770 = vld [vmem:[%s769] ss:$8 sm:$0xf]
    %v771 = vmul.f32 %v702, %v765
    %v772 = vadd.f32 %v770, %v771
    %v773 = vtanh.pop %v772
    %s774 = scalar_lea.vmem [#allocation3], 32
    %775 = vst.msk [vmem:[%s774] ss:$8 sm:$0xf] %vm710, %v773
    %776 = vst.msk [vmem:[%s774] ss:$8 sm:$0x0] %vm710, %v773
    %s777 = scalar_lea.vmem [#allocation2], 33
    %v778 = vld [vmem:[%s777] ss:$8 sm:$0xf]
    %v779 = vmul.f32 %v702, %v773
    %v780 = vadd.f32 %v778, %v779
    %v781 = vtanh.pop %v780
    %s782 = scalar_lea.vmem [#allocation3], 33
    %783 = vst.msk [vmem:[%s782] ss:$8 sm:$0xf] %vm710, %v781
    %784 = vst.msk [vmem:[%s782] ss:$8 sm:$0x0] %vm710, %v781
    %s785 = scalar_lea.vmem [#allocation2], 34
    %v786 = vld [vmem:[%s785] ss:$8 sm:$0xf]
    %v787 = vmul.f32 %v702, %v781
    %v788 = vadd.f32 %v786, %v787
    %v789 = vtanh.pop %v788
    %s790 = scalar_lea.vmem [#allocation3], 34
    %791 = vst.msk [vmem:[%s790] ss:$8 sm:$0xf] %vm710, %v789
    %792 = vst.msk [vmem:[%s790] ss:$8 sm:$0x0] %vm710, %v789
    %s793 = scalar_lea.vmem [#allocation2], 35
    %v794 = vld [vmem:[%s793] ss:$8 sm:$0xf]
    %v795 = vmul.f32 %v702, %v789
    %v796 = vadd.f32 %v794, %v795
    %v797 = vtanh.pop %v796
    %s798 = scalar_lea.vmem [#allocation3], 35
    %799 = vst.msk [vmem:[%s798] ss:$8 sm:$0xf] %vm710, %v797
    %800 = vst.msk [vmem:[%s798] ss:$8 sm:$0x0] %vm710, %v797
    %s801 = scalar_lea.vmem [#allocation2], 36
    %v802 = vld [vmem:[%s801] ss:$8 sm:$0xf]
    %v803 = vmul.f32 %v702, %v797
    %v804 = vadd.f32 %v802, %v803
    %v805 = vtanh.pop %v804
    %s806 = scalar_lea.vmem [#allocation3], 36
    %807 = vst.msk [vmem:[%s806] ss:$8 sm:$0xf] %vm710, %v805
    %808 = vst.msk [vmem:[%s806] ss:$8 sm:$0x0] %vm710, %v805
    %s809 = scalar_lea.vmem [#allocation2], 37
    %v810 = vld [vmem:[%s809] ss:$8 sm:$0xf]
    %v811 = vmul.f32 %v702, %v805
    %v812 = vadd.f32 %v810, %v811
    %v813 = vtanh.pop %v812
    %s814 = scalar_lea.vmem [#allocation3], 37
    %815 = vst.msk [vmem:[%s814] ss:$8 sm:$0xf] %vm710, %v813
    %816 = vst.msk [vmem:[%s814] ss:$8 sm:$0x0] %vm710, %v813
    %s817 = scalar_lea.vmem [#allocation2], 38
    %v818 = vld [vmem:[%s817] ss:$8 sm:$0xf]
    %v819 = vmul.f32 %v702, %v813
    %v820 = vadd.f32 %v818, %v819
    %v821 = vtanh.pop %v820
    %s822 = scalar_lea.vmem [#allocation3], 38
    %823 = vst.msk [vmem:[%s822] ss:$8 sm:$0xf] %vm710, %v821
    %824 = vst.msk [vmem:[%s822] ss:$8 sm:$0x0] %vm710, %v821
    %s825 = scalar_lea.vmem [#allocation2], 39
    %v826 = vld [vmem:[%s825] ss:$8 sm:$0xf]
    %v827 = vmul.f32 %v702, %v821
    %v828 = vadd.f32 %v826, %v827
    %v829 = vtanh.pop %v828
    %s830 = scalar_lea.vmem [#allocation3], 39
    %831 = vst.msk [vmem:[%s830] ss:$8 sm:$0xf] %vm710, %v829
    %832 = vst.msk [vmem:[%s830] ss:$8 sm:$0x0] %vm710, %v829
    %s833 = scalar_lea.vmem [#allocation2], 64
    %v834 = vld [vmem:[%s833] ss:$8 sm:$0xf]
    %v835 = vmul.f32 %v702, %v829
    %v836 = vadd.f32 %v834, %v835
    %v837 = vtanh.pop %v836
    %s838 = scalar_lea.vmem [#allocation3], 64
    %839 = vst.msk [vmem:[%s838] ss:$8 sm:$0xf] %vm710, %v837
    %840 = vst.msk [vmem:[%s838] ss:$8 sm:$0x0] %vm710, %v837
    %s841 = scalar_lea.vmem [#allocation2], 65
    %v842 = vld [vmem:[%s841] ss:$8 sm:$0xf]
    %v843 = vmul.f32 %v702, %v837
    %v844 = vadd.f32 %v842, %v843
    %v845 = vtanh.pop %v844
    %s846 = scalar_lea.vmem [#allocation3], 65
    %847 = vst.msk [vmem:[%s846] ss:$8 sm:$0xf] %vm710, %v845
    %848 = vst.msk [vmem:[%s846] ss:$8 sm:$0x0] %vm710, %v845
    %s849 = scalar_lea.vmem [#allocation2], 66
    %v850 = vld [vmem:[%s849] ss:$8 sm:$0xf]
    %v851 = vmul.f32 %v702, %v845
    %v852 = vadd.f32 %v850, %v851
    %v853 = vtanh.pop %v852
    %s854 = scalar_lea.vmem [#allocation3], 66
    %855 = vst.msk [vmem:[%s854] ss:$8 sm:$0xf] %vm710, %v853
    %856 = vst.msk [vmem:[%s854] ss:$8 sm:$0x0] %vm710, %v853
    %s857 = scalar_lea.vmem [#allocation2], 67
    %v858 = vld [vmem:[%s857] ss:$8 sm:$0xf]
    %v859 = vmul.f32 %v702, %v853
    %v860 = vadd.f32 %v858, %v859
    %v861 = vtanh.pop %v860
    %s862 = scalar_lea.vmem [#allocation3], 67
    %863 = vst.msk [vmem:[%s862] ss:$8 sm:$0xf] %vm710, %v861
    %864 = vst.msk [vmem:[%s862] ss:$8 sm:$0x0] %vm710, %v861
    %s865 = scalar_lea.vmem [#allocation2], 68
    %v866 = vld [vmem:[%s865] ss:$8 sm:$0xf]
    %v867 = vmul.f32 %v702, %v861
    %v868 = vadd.f32 %v866, %v867
    %v869 = vtanh.pop %v868
    %s870 = scalar_lea.vmem [#allocation3], 68
    %871 = vst.msk [vmem:[%s870] ss:$8 sm:$0xf] %vm710, %v869
    %872 = vst.msk [vmem:[%s870] ss:$8 sm:$0x0] %vm710, %v869
    %s873 = scalar_lea.vmem [#allocation2], 69
    %v874 = vld [vmem:[%s873] ss:$8 sm:$0xf]
    %v875 = vmul.f32 %v702, %v869
    %v876 = vadd.f32 %v874, %v875
    %v877 = vtanh.pop %v876
    %s878 = scalar_lea.vmem [#allocation3], 69
    %879 = vst.msk [vmem:[%s878] ss:$8 sm:$0xf] %vm710, %v877
    %880 = vst.msk [vmem:[%s878] ss:$8 sm:$0x0] %vm710, %v877
    %s881 = scalar_lea.vmem [#allocation2], 70
    %v882 = vld [vmem:[%s881] ss:$8 sm:$0xf]
    %v883 = vmul.f32 %v702, %v877
    %v884 = vadd.f32 %v882, %v883
    %v885 = vtanh.pop %v884
    %s886 = scalar_lea.vmem [#allocation3], 70
    %887 = vst.msk [vmem:[%s886] ss:$8 sm:$0xf] %vm710, %v885
    %888 = vst.msk [vmem:[%s886] ss:$8 sm:$0x0] %vm710, %v885
    %s889 = scalar_lea.vmem [#allocation2], 71
    %v890 = vld [vmem:[%s889] ss:$8 sm:$0xf]
    %v891 = vmul.f32 %v702, %v885
    %v892 = vadd.f32 %v890, %v891
    %v893 = vtanh.pop %v892
    %s894 = scalar_lea.vmem [#allocation3], 71
    %895 = vst.msk [vmem:[%s894] ss:$8 sm:$0xf] %vm710, %v893
    %896 = vst.msk [vmem:[%s894] ss:$8 sm:$0x0] %vm710, %v893
    %s897 = scalar_lea.vmem [#allocation2], 96
    %v898 = vld [vmem:[%s897] ss:$8 sm:$0xf]
    %v899 = vmul.f32 %v702, %v893
    %v900 = vadd.f32 %v898, %v899
    %v901 = vtanh.pop %v900
    %s902 = scalar_lea.vmem [#allocation3], 96
    %903 = vst.msk [vmem:[%s902] ss:$8 sm:$0xf] %vm710, %v901
    %904 = vst.msk [vmem:[%s902] ss:$8 sm:$0x0] %vm710, %v901
    %s905 = scalar_lea.vmem [#allocation2], 97
    %v906 = vld [vmem:[%s905] ss:$8 sm:$0xf]
    %v907 = vmul.f32 %v702, %v901
    %v908 = vadd.f32 %v906, %v907
    %v909 = vtanh.pop %v908
    %s910 = scalar_lea.vmem [#allocation3], 97
    %911 = vst.msk [vmem:[%s910] ss:$8 sm:$0xf] %vm710, %v909
    %912 = vst.msk [vmem:[%s910] ss:$8 sm:$0x0] %vm710, %v909
    %s913 = scalar_lea.vmem [#allocation2], 98
    %v914 = vld [vmem:[%s913] ss:$8 sm:$0xf]
    %v915 = vmul.f32 %v702, %v909
    %v916 = vadd.f32 %v914, %v915
    %v917 = vtanh.pop %v916
    %s918 = scalar_lea.vmem [#allocation3], 98
    %919 = vst.msk [vmem:[%s918] ss:$8 sm:$0xf] %vm710, %v917
    %920 = vst.msk [vmem:[%s918] ss:$8 sm:$0x0] %vm710, %v917
    %s921 = scalar_lea.vmem [#allocation2], 99
    %v922 = vld [vmem:[%s921] ss:$8 sm:$0xf]
    %v923 = vmul.f32 %v702, %v917
    %v924 = vadd.f32 %v922, %v923
    %v925 = vtanh.pop %v924
    %s926 = scalar_lea.vmem [#allocation3], 99
    %927 = vst.msk [vmem:[%s926] ss:$8 sm:$0xf] %vm710, %v925
    %928 = vst.msk [vmem:[%s926] ss:$8 sm:$0x0] %vm710, %v925
    %s929 = scalar_lea.vmem [#allocation2], 100
    %v930 = vld [vmem:[%s929] ss:$8 sm:$0xf]
    %v931 = vmul.f32 %v702, %v925
    %v932 = vadd.f32 %v930, %v931
    %v933 = vtanh.pop %v932
    %s934 = scalar_lea.vmem [#allocation3], 100
    %935 = vst.msk [vmem:[%s934] ss:$8 sm:$0xf] %vm710, %v933
    %936 = vst.msk [vmem:[%s934] ss:$8 sm:$0x0] %vm710, %v933
    %s937 = scalar_lea.vmem [#allocation2], 101
    %v938 = vld [vmem:[%s937] ss:$8 sm:$0xf]
    %v939 = vmul.f32 %v702, %v933
    %v940 = vadd.f32 %v938, %v939
    %v941 = vtanh.pop %v940
    %s942 = scalar_lea.vmem [#allocation3], 101
    %943 = vst.msk [vmem:[%s942] ss:$8 sm:$0xf] %vm710, %v941
    %944 = vst.msk [vmem:[%s942] ss:$8 sm:$0x0] %vm710, %v941
    %s945 = scalar_lea.vmem [#allocation2], 102
    %v946 = vld [vmem:[%s945] ss:$8 sm:$0xf]
    %v947 = vmul.f32 %v702, %v941
    %v948 = vadd.f32 %v946, %v947
    %v949 = vtanh.pop %v948
    %s950 = scalar_lea.vmem [#allocation3], 102
    %951 = vst.msk [vmem:[%s950] ss:$8 sm:$0xf] %vm710, %v949
    %952 = vst.msk [vmem:[%s950] ss:$8 sm:$0x0] %vm710, %v949
    %s953 = scalar_lea.vmem [#allocation2], 103
    %v954 = vld [vmem:[%s953] ss:$8 sm:$0xf]
    %v955 = vmul.f32 %v702, %v949
    %v956 = vadd.f32 %v954, %v955
    %v957 = vtanh.pop %v956
    %s958 = scalar_lea.vmem [#allocation3], 103
    %959 = vst.msk [vmem:[%s958] ss:$8 sm:$0xf] %vm710, %v957
    %960 = vst.msk [vmem:[%s958] ss:$8 sm:$0x0] %vm710, %v957
    %v961 = vld [vmem:[%s4] sm:$0x1]
    %v962 = vld [vmem:[#allocation3] sm:$0xff]
    %v963 = vld [vmem:[#allocation3 + $0x8] sm:$0xff]
    %v964 = vld [vmem:[#allocation3 + $0x10] sm:$0xff]
    %v965 = vld [vmem:[#allocation3 + $0x18] sm:$0xff]
    %v966 = vld [vmem:[#allocation3 + $0x20] sm:$0xff]
    %v967 = vld [vmem:[#allocation3 + $0x28] sm:$0xff]
    %v968 = vld [vmem:[#allocation3 + $0x30] sm:$0xff]
    %v969 = vld [vmem:[#allocation3 + $0x38] sm:$0xff]
    %v970 = vld [vmem:[#allocation3 + $0x40] sm:$0xff]
    %v971 = vld [vmem:[#allocation3 + $0x48] sm:$0xff]
    %v972 = vld [vmem:[#allocation3 + $0x50] sm:$0xff]
    %v973 = vld [vmem:[#allocation3 + $0x58] sm:$0xff]
    %v974 = vld [vmem:[#allocation3 + $0x60] sm:$0xff]
    %v975 = vld [vmem:[#allocation3 + $0x68] sm:$0xff]
    %v976 = vld [vmem:[#allocation3 + $0x70] sm:$0xff]
    %v977 = vld [vmem:[#allocation3 + $0x78] sm:$0xff]
    %vm978 = vcmask 261120
    %v980 = vsel %vm978, %v961, 0
    %982 = vmatprep.subr.mxu0 %v963
    %983 = vmatpush1.msra.mxu0 %v962
    %984 = vmatprep.subr.mxu0 %v967
    %985 = vmatpush1.msra.mxu0 %v966
    %986 = vmatprep.subr.mxu0 %v971
    %987 = vmatpush1.msra.mxu0 %v970
    %988 = vmatprep.subr.mxu0 %v975
    %989 = vmatpush1.msra.mxu0 %v974
    %990 = vmatprep.subr.mxu0 0.0
    %991 = vmatpush1.msra.mxu0 0.0
    %992 = vmatprep.subr.mxu0 0.0
    %993 = vmatpush1.msra.mxu0 0.0
    %994 = vmatprep.subr.mxu0 0.0
    %995 = vmatpush1.msra.mxu0 0.0
    %996 = vmatprep.subr.mxu0 0.0
    %997 = vmatpush1.msra.mxu0 0.0
    %998 = vmatprep.subr.mxu0 0.0
    %999 = vmatpush1.msra.mxu0 0.0
    %1000 = vmatprep.subr.mxu0 0.0
    %1001 = vmatpush1.msra.mxu0 0.0
    %1002 = vmatprep.subr.mxu0 0.0
    %1003 = vmatpush1.msra.mxu0 0.0
    %1004 = vmatprep.subr.mxu0 0.0
    %1005 = vmatpush1.msra.mxu0 0.0
    %1006 = vmatprep.subr.mxu0 0.0
    %1007 = vmatpush1.msra.mxu0 0.0
    %1008 = vmatprep.subr.mxu0 0.0
    %1009 = vmatpush1.msra.mxu0 0.0
    %1010 = vmatprep.subr.mxu0 0.0
    %1011 = vmatpush1.msra.mxu0 0.0
    %1012 = vmatprep.subr.mxu0 0.0
    %1013 = vmatpush1.msra.mxu0 0.0
    %1014 = vmatprep.subr.mxu0 0.0
    %1015 = vmatpush1.msra.mxu0 0.0
    %1016 = vmatprep.subr.mxu0 0.0
    %1017 = vmatpush1.msra.mxu0 0.0
    %1018 = vmatprep.subr.mxu0 0.0
    %1019 = vmatpush1.msra.mxu0 0.0
    %1020 = vmatprep.subr.mxu0 0.0
    %1021 = vmatpush1.msra.mxu0 0.0
    %1022 = vmatprep.subr.mxu0 0.0
    %1023 = vmatpush1.msra.mxu0 0.0
    %1024 = vmatprep.subr.mxu0 0.0
    %1025 = vmatpush1.msra.mxu0 0.0
    %1026 = vmatprep.subr.mxu0 0.0
    %1027 = vmatpush1.msra.mxu0 0.0
    %1028 = vmatprep.subr.mxu0 0.0
    %1029 = vmatpush1.msra.mxu0 0.0
    %1030 = vmatprep.subr.mxu0 0.0
    %1031 = vmatpush1.msra.mxu0 0.0
    %1032 = vmatprep.subr.mxu0 0.0
    %1033 = vmatpush1.msra.mxu0 0.0
    %1034 = vmatprep.subr.mxu0 0.0
    %1035 = vmatpush1.msra.mxu0 0.0
    %1036 = vmatprep.subr.mxu0 0.0
    %1037 = vmatpush1.msra.mxu0 0.0
    %1038 = vmatprep.subr.mxu0 0.0
    %1039 = vmatpush1.msra.mxu0 0.0
    %1040 = vmatprep.subr.mxu0 0.0
    %1041 = vmatpush1.msra.mxu0 0.0
    %1042 = vmatprep.subr.mxu0 0.0
    %1043 = vmatpush1.msra.mxu0 0.0
    %1044 = vmatprep.subr.mxu0 0.0
    %1045 = vmatpush1.msra.mxu0 0.0
    %1046 = vmatprep.mubr.f32.mxu0 0.0
    %1047 = vmatmul.mubr.f32.gmra.mrb[0].mxu0 %v980
    %v1048 = vpop.f32.mrb[0].mxu0
    %v1049 = vadd.f32 0.0, %v1048
    %v1050 = vpop.f32.mrb[0].mxu0
    %v1051 = vadd.f32 0.0, %v1050
    %1052 = vdwg.mxu0
    %1053 = vmatprep.subr.mxu0 %v965
    %1054 = vmatpush1.msra.mxu0 %v964
    %1055 = vmatprep.subr.mxu0 %v969
    %1056 = vmatpush1.msra.mxu0 %v968
    %1057 = vmatprep.subr.mxu0 %v973
    %1058 = vmatpush1.msra.mxu0 %v972
    %1059 = vmatprep.subr.mxu0 %v977
    %1060 = vmatpush1.msra.mxu0 %v976
    %1061 = vmatprep.subr.mxu0 0.0
    %1062 = vmatpush1.msra.mxu0 0.0
    %1063 = vmatprep.subr.mxu0 0.0
    %1064 = vmatpush1.msra.mxu0 0.0
    %1065 = vmatprep.subr.mxu0 0.0
    %1066 = vmatpush1.msra.mxu0 0.0
    %1067 = vmatprep.subr.mxu0 0.0
    %1068 = vmatpush1.msra.mxu0 0.0
    %1069 = vmatprep.subr.mxu0 0.0
    %1070 = vmatpush1.msra.mxu0 0.0
    %1071 = vmatprep.subr.mxu0 0.0
    %1072 = vmatpush1.msra.mxu0 0.0
    %1073 = vmatprep.subr.mxu0 0.0
    %1074 = vmatpush1.msra.mxu0 0.0
    %1075 = vmatprep.subr.mxu0 0.0
    %1076 = vmatpush1.msra.mxu0 0.0
    %1077 = vmatprep.subr.mxu0 0.0
    %1078 = vmatpush1.msra.mxu0 0.0
    %1079 = vmatprep.subr.mxu0 0.0
    %1080 = vmatpush1.msra.mxu0 0.0
    %1081 = vmatprep.subr.mxu0 0.0
    %1082 = vmatpush1.msra.mxu0 0.0
    %1083 = vmatprep.subr.mxu0 0.0
    %1084 = vmatpush1.msra.mxu0 0.0
    %1085 = vmatprep.subr.mxu0 0.0
    %1086 = vmatpush1.msra.mxu0 0.0
    %1087 = vmatprep.subr.mxu0 0.0
    %1088 = vmatpush1.msra.mxu0 0.0
    %1089 = vmatprep.subr.mxu0 0.0
    %1090 = vmatpush1.msra.mxu0 0.0
    %1091 = vmatprep.subr.mxu0 0.0
    %1092 = vmatpush1.msra.mxu0 0.0
    %1093 = vmatprep.subr.mxu0 0.0
    %1094 = vmatpush1.msra.mxu0 0.0
    %1095 = vmatprep.subr.mxu0 0.0
    %1096 = vmatpush1.msra.mxu0 0.0
    %1097 = vmatprep.subr.mxu0 0.0
    %1098 = vmatpush1.msra.mxu0 0.0
    %1099 = vmatprep.subr.mxu0 0.0
    %1100 = vmatpush1.msra.mxu0 0.0
    %1101 = vmatprep.subr.mxu0 0.0
    %1102 = vmatpush1.msra.mxu0 0.0
    %1103 = vmatprep.subr.mxu0 0.0
    %1104 = vmatpush1.msra.mxu0 0.0
    %1105 = vmatprep.subr.mxu0 0.0
    %1106 = vmatpush1.msra.mxu0 0.0
    %1107 = vmatprep.subr.mxu0 0.0
    %1108 = vmatpush1.msra.mxu0 0.0
    %1109 = vmatprep.subr.mxu0 0.0
    %1110 = vmatpush1.msra.mxu0 0.0
    %1111 = vmatprep.subr.mxu0 0.0
    %1112 = vmatpush1.msra.mxu0 0.0
    %1113 = vmatprep.subr.mxu0 0.0
    %1114 = vmatpush1.msra.mxu0 0.0
    %1115 = vmatprep.subr.mxu0 0.0
    %1116 = vmatpush1.msra.mxu0 0.0
    %1117 = vmatprep.mubr.f32.mxu0 0.0
    %1118 = vmatmul.mubr.f32.gmra.mrb[0].mxu0 %v980
    %v1119 = vpop.f32.mrb[0].mxu0
    %v1120 = vadd.f32 0.0, %v1119
    %v1121 = vpop.f32.mrb[0].mxu0
    %v1122 = vadd.f32 0.0, %v1121
    %1123 = vdwg.mxu0
    %s1124 = sld [smem:[#allocation5]]
    %v1125 = vstv %s1124
    %v1126 = vadd.f32 %v1049, %v1125
    %v1127 = vadd.f32 %v1051, %v1125
    %v1128 = vadd.f32 %v1120, %v1125
    %v1129 = vadd.f32 %v1122, %v1125
    %v1130 = vsub.f32 0.0, %v1126
    %v1131 = vsub.f32 0.0, %v1127
    %v1132 = vsub.f32 0.0, %v1128
    %v1133 = vsub.f32 0.0, %v1129
    %v1134 = vmul.f32 %v1130, 1.442695
    %v1135 = vpow.pop %v1134
    %v1136 = vmul.f32 %v1131, 1.442695
    %v1137 = vpow.pop %v1136
    %v1138 = vmul.f32 %v1132, 1.442695
    %v1139 = vpow.pop %v1138
    %v1140 = vmul.f32 %v1133, 1.442695
    %v1141 = vpow.pop %v1140
    %v1142 = vadd.f32 %v1135, 1.0
    %v1143 = vadd.f32 %v1137, 1.0
    %v1144 = vadd.f32 %v1139, 1.0
    %v1145 = vadd.f32 %v1141, 1.0
    %v1146 = vrcp.pop %v1142
    %v1147 = vmul.f32 1.0, %v1146
    %v1148 = vrcp.pop %v1143
    %v1149 = vmul.f32 1.0, %v1148
    %v1150 = vrcp.pop %v1144
    %v1151 = vmul.f32 1.0, %v1150
    %v1152 = vrcp.pop %v1145
    %v1153 = vmul.f32 1.0, %v1152
    %v1158 = vcombine.low %v1147, %v1149
    %v1159 = vcombine.low %v1151, %v1153
    %v1161 = vunpack.c.l.s4 1966171168
    %v1162 = vunpack.c.0.s8 %v1161
    %v1163 = vlaneseq
    %v1164 = vshrl.u32 %v1163, 7
    %v1165 = vsub.s32 %v1162, %v1164
    %v1166 = vrot.slane %v1158, %v1165
    %v1168 = vunpack.c.l.s4 1966171168
    %v1169 = vunpack.c.0.s8 %v1168
    %v1170 = vlaneseq
    %v1171 = vshrl.u32 %v1170, 7
    %v1172 = vsub.s32 %v1169, %v1171
    %v1173 = vrot.slane %v1159, %v1172
    %v1174 = vcombine.low %v1166, %v1173
    %v1176 = vunpack.c.l.s4 1966171168
    %v1177 = vunpack.c.0.s8 %v1176
    %v1178 = vlaneseq
    %v1179 = vshrl.u32 %v1178, 7
    %v1180 = vsub.s32 %v1177, %v1179
    %v1181 = vrot.slane %v1174, %v1180
    %1183 = vst.msk [vmem:[#allocation13] sm:$0xf] %vm710, %v1181
    // Predicated region
    $region38: #{tpu_custom_call.1} parent=1 // pred_check
      _
    $region39: #{tpu_custom_call.1} parent=1 // pred_check_branch
      %1185 = sbr.rel (0) target = $region41
    $region40: #{tpu_custom_call.1} parent=1 // pred_region
      %s1187 = ssub.s32 64, 64
      %1188 = vsyncadd [#allocation8], %s1187
      %s1190 = sshll.u32 [#allocation13], 4
      %s1191 = int_to_ptr.vmem [resolvable:$true] %s1190
      %1193 = dma.vmem_to_hbm [thread:$0]  %s1191, 64, %s6, [#allocation8]
    $region41: #{tpu_custom_call.1} parent=1 // pred_fallthru
      _
    // Predicated region
    $region42: #{tpu_custom_call.1} parent=1 // pred_check
      _
    $region43: #{tpu_custom_call.1} parent=1 // pred_check_branch
      %1195 = sbr.rel (0) target = $region45
    $region44: #{tpu_custom_call.1} parent=1 // pred_region
      %1196 = dma.done [#allocation8], 64
    $region45: #{tpu_custom_call.1} parent=1 // pred_fallthru
      _
    %1197 = vsyncpa [#allocation7], 1
    %1198 = vsyncpa [#allocation11], 1
    %1199 = vsyncpa [#allocation8], 1
    %1200 = vsyncpa [#allocation9], 1

</llo_original>
